<compile_context>
chip_gen: v6e
topology: v6e:2x2x1
jax: 0.10.0
libtpu: 0.0.40
codegen_flags: <defaults>
</compile_context>

<pallas_src>
import functools
import math

import jax
import jax.numpy as jnp
from jax.experimental import pallas as pl
from jax.experimental.pallas import tpu as pltpu


LANE = 128
SUBLANE = 8


def _round_up(x, m):
    return ((x + m - 1) // m) * m


# ----------------------------- Pallas kernel -------------------------------

def _fused_init_attention_kernel(enc_ref, whc_ref, bhc_ref, we_ref, be_ref,
                                 wd_ref, bd_ref, wf_ref,
                                 hc_ref, awe_ref, alpha_ref,
                                 *, n_pixels, d_pad):
    """Fused init_hidden_state + Attention.foward on one batch tile.

    enc_ref : (TB, P_pad, E) bf16 encoder tile (pixel dim zero-padded to %8)
    whc_ref : (E, 2*D_pad) bf16  init_h|init_c fused weight; bhc: (1, 2*D_pad) f32
    we_ref  : (E, A_pad)   bf16  encoder_att weight;         be : (1, A_pad)  f32
    wd_ref  : (D_pad,A_pad)bf16  decoder_att weight;         bd : (1, A_pad)  f32
    wf_ref  : (1, A_pad)   f32   full_att weight (bias dropped: softmax shift-inv.)
    Outputs (f32): hc (TB, 2*D_pad), awe (TB, E), alpha (TB, P_pad)
    """
    enc = enc_ref[...]                                                  # bf16
    TB, P_pad, E = enc.shape
    enc_f32 = enc.astype(jnp.float32)

    # ---------------- init_hidden_state ----------------
    # mean over real pixels (padded rows are zero); one fused (E, 2*D_pad) matmul.
    mean_enc = jnp.sum(enc_f32, axis=1) * (1.0 / n_pixels)              # (TB, E)
    hc = jnp.dot(mean_enc.astype(jnp.bfloat16), whc_ref[...],
                 preferred_element_type=jnp.float32) + bhc_ref[...]     # (TB, 2*D_pad)
    hc_ref[...] = hc
    h = hc[:, :d_pad]                                                   # lane-aligned slice

    # ---------------- Attention.foward ------------------
    # att1 = encoder_att(encoder_out): one (TB*P_pad, E) @ (E, A_pad) MXU matmul.
    # P_pad % 8 == 0, so the (TB,P_pad,E) <-> (TB*P_pad,E) reshape is layout-free.
    enc2d = enc.reshape(TB * P_pad, E)
    att1 = (jnp.dot(enc2d, we_ref[...], preferred_element_type=jnp.float32)
            + be_ref[...]).reshape(TB, P_pad, -1)                       # (TB, P_pad, A_pad)

    # att2 = decoder_att(h): padded D/A columns are zero, so the result is exact.
    att2 = jnp.dot(h.astype(jnp.bfloat16), wd_ref[...],
                   preferred_element_type=jnp.float32) + bd_ref[...]    # (TB, A_pad)

    pre = jnp.maximum(att1 + att2[:, None, :], 0.0)                     # relu, f32

    # full_att(...).squeeze(2).  The full_att bias is constant over the softmax
    # axis (shift invariance) so it cannot change alpha and is omitted.
    # TODO(synk): could be moved to the MXU if a bundle dump shows the VALU
    # slot saturating; kernel is HBM-bound so kept on VPU/XLU.
    att = jnp.sum(pre * wf_ref[...], axis=-1)                           # (TB, P_pad)

    if P_pad != n_pixels:
        # zero-padded pixels must not receive attention mass
        pix = jax.lax.broadcasted_iota(jnp.int32, (TB, P_pad), 1)
        att = jnp.where(pix < n_pixels, att, -jnp.inf)

    # softmax over the pixel dimension (dim=1 in the reference)
    m = jnp.max(att, axis=-1, keepdims=True)
    e = jnp.exp(att - m)
    alpha = e * pl.reciprocal(jnp.sum(e, axis=-1, keepdims=True), approx=True)
    alpha_ref[...] = alpha

    # attention_weighted_encoding = (encoder_out * alpha.unsqueeze(2)).sum(dim=1)
    awe_ref[...] = jnp.sum(enc_f32 * alpha[:, :, None], axis=1)         # (TB, E)


# ----------------------------- wrappers -------------------------------------

def _prepare_weights(params):
    """Pre-transpose to MXU (K, N) layouts, zero-pad N dims to 128, fuse
    init_h|init_c into one weight, and cast matmul weights to bf16."""
    A = params['enc_att_w'].shape[0]
    D = params['init_h_w'].shape[0]
    A_pad = _round_up(A, LANE)
    D_pad = _round_up(D, LANE)

    def pad_cols(x, n):
        return jnp.pad(x, ((0, 0), (0, n - x.shape[1])))

    def pad_rows(x, n):
        return jnp.pad(x, ((0, n - x.shape[0]), (0, 0)))

    whc = jnp.concatenate([pad_cols(params['init_h_w'].T, D_pad),
                           pad_cols(params['init_c_w'].T, D_pad)],
                          axis=1).astype(jnp.bfloat16)                   # (E, 2*D_pad)
    bhc = jnp.concatenate([pad_cols(params['init_h_b'], D_pad),
                           pad_cols(params['init_c_b'], D_pad)], axis=1)  # (1, 2*D_pad) f32
    we = pad_cols(params['enc_att_w'].T, A_pad).astype(jnp.bfloat16)     # (E, A_pad)
    be = pad_cols(params['enc_att_b'], A_pad)                            # (1, A_pad) f32
    wd = pad_rows(pad_cols(params['dec_att_w'].T, A_pad),
                  D_pad).astype(jnp.bfloat16)                            # (D_pad, A_pad)
    bd = pad_cols(params['dec_att_b'], A_pad)                            # (1, A_pad) f32
    wf = pad_cols(params['full_att_w'], A_pad)                           # (1, A_pad) f32
    return (whc, bhc, we, be, wd, bd, wf), A_pad, D_pad


def _vmem_capacity_bytes():
    try:
        return int(pltpu.get_tpu_info().vmem_capacity_bytes)
    except Exception:
        return 64 * 1024 * 1024   # conservative fallback (v7x per-core VMEM)


def _pick_batch_tile(B, avail_bytes, per_row_bytes):
    tb = max(1, avail_bytes // per_row_bytes)
    if B >= 16:
        # Keep >= 2 grid steps so dimension_semantics=("parallel",) can shard
        # the batch axis across v7x's two TensorCores (harmless on v5e/v6e).
        tb = min(tb, _round_up(pl.cdiv(B, 2), SUBLANE))
    if tb >= B:
        return B
    if tb < SUBLANE:
        return B if B < SUBLANE else SUBLANE
    return (tb // SUBLANE) * SUBLANE


def _vmem_plan(B, P_pad, E, A_pad, D_pad):
    """Derive (batch tile, vmem_limit_bytes) from the queried per-core VMEM
    capacity, accounting for grid-resident weights, double-buffered enc/output
    tiles and the f32 intermediates."""
    cap = _vmem_capacity_bytes()
    budget = int(cap * 0.70)       # ~89 MiB on v5e/v6e (128 MiB), ~45 MiB on v7x (64 MiB)

    weight_bytes = (2 * (E * 2 * D_pad + E * A_pad + D_pad * A_pad)   # bf16 weights
                    + 4 * (2 * D_pad + 2 * A_pad + A_pad))            # f32 biases + wf
    resident = 2 * weight_bytes    # conservative: assume the compiler gives them 2 buffers

    per_row = (2 * 2 * P_pad * E          # bf16 enc tile, double-buffered
               + 4 * P_pad * E            # f32 enc copy (mean / awe elementwise)
               + 2 * 4 * P_pad * A_pad    # att1 + relu'd pre (f32)
               + 2 * 4 * 2 * D_pad        # hc out, double-buffered
               + 2 * 4 * E                # awe out, double-buffered
               + 2 * 4 * P_pad            # alpha out, double-buffered
               + 6 * 4 * P_pad)           # logits / exp / temporaries

    avail = max(per_row, budget - resident - (2 << 20))
    tb = _pick_batch_tile(B, avail, per_row)
    need = resident + tb * per_row + (4 << 20)
    vmem_limit = int(min(int(cap * 0.90), max(int(need * 1.2), 32 << 20)))
    return tb, vmem_limit


def init_hidden_and_attention(encoder_out, params):
    """Fused init_hidden_state + Attention.foward on (B, P, E) encoder output."""
    B, P, E = encoder_out.shape
    D = params['init_h_w'].shape[0]
    (whc, bhc, we, be, wd, bd, wf), A_pad, D_pad = _prepare_weights(params)

    # Pad pixel dim to a sublane multiple (layout-free in-kernel reshape; padded
    # pixels masked to -inf pre-softmax) and stream the encoder as bf16: halves
    # HBM bytes of the dominant tensor and feeds the MXU at native bf16 rate.
    P_pad = _round_up(P, SUBLANE)
    enc = encoder_out
    if P_pad != P:
        enc = jnp.pad(enc, ((0, 0), (0, P_pad - P), (0, 0)))
    enc = enc.astype(jnp.bfloat16)

    TB, vmem_limit = _vmem_plan(B, P_pad, E, A_pad, D_pad)
    grid = (pl.cdiv(B, TB),)

    kernel = functools.partial(_fused_init_attention_kernel,
                               n_pixels=P, d_pad=D_pad)

    flops = 2 * B * (P_pad * E * A_pad + E * 2 * D_pad + D_pad * A_pad
                     + P_pad * A_pad + 2 * P_pad * E)
    bytes_accessed = (2 * B * P_pad * E
                      + 2 * (E * 2 * D_pad + E * A_pad + D_pad * A_pad)
                      + 4 * B * (2 * D_pad + E + P_pad))
    cost = pl.CostEstimate(flops=int(flops), transcendentals=int(B * P_pad),
                           bytes_accessed=int(bytes_accessed))

    out_shape = (jax.ShapeDtypeStruct((B, 2 * D_pad), jnp.float32),
                 jax.ShapeDtypeStruct((B, E), jnp.float32),
                 jax.ShapeDtypeStruct((B, P_pad), jnp.float32))
    out_specs = (pl.BlockSpec((TB, 2 * D_pad), lambda i: (i, 0)),
                 pl.BlockSpec((TB, E), lambda i: (i, 0)),
                 pl.BlockSpec((TB, P_pad), lambda i: (i, 0)))
    enc_spec = pl.BlockSpec((TB, P_pad, E), lambda i: (i, 0, 0))
    args = (enc, whc, bhc, we, be, wd, bd, wf)

    def _run(single_buffer_weights):
        if single_buffer_weights:
            # Constant-index weights are never re-DMA'd; one VMEM buffer is
            # enough, freeing VMEM for a larger batch tile.
            def const(shape):
                return pl.BlockSpec(shape, lambda i: (0,) * len(shape),
                                    pipeline_mode=pl.Buffered(1))
        else:
            def const(shape):
                return pl.BlockSpec(shape, lambda i: (0,) * len(shape))
        return pl.pallas_call(
            kernel,
            out_shape=out_shape,
            grid=grid,
            in_specs=[enc_spec,
                      const(whc.shape), const(bhc.shape),
                      const(we.shape), const(be.shape),
                      const(wd.shape), const(bd.shape),
                      const(wf.shape)],
            out_specs=out_specs,
            compiler_params=pltpu.CompilerParams(
                dimension_semantics=("parallel",),
                vmem_limit_bytes=vmem_limit),
            cost_estimate=cost,
        )(*args)

    try:
        hc, awe, alpha_pad = _run(True)
    except Exception:
        # pipeline_mode=pl.Buffered(1) unsupported on this jax/libtpu build:
        # fall back to default double-buffered weight specs (already budgeted).
        hc, awe, alpha_pad = _run(False)

    # Slice zero-padded dims back (padded columns are exactly zero, padded
    # pixels carry exactly zero attention mass).
    h = hc[:, :D]
    c = hc[:, D_pad:D_pad + D]
    alpha = alpha_pad[:, :P]
    return h, c, awe, alpha


def decoder_forward(params, encoder_out_4d, encoded_captions, caption_lengths):
    """Mirrors DecoderWithAttention.forward (truncated reference) and runs the
    module's compute-heavy sub-blocks as one fused Pallas kernel."""
    B = encoder_out_4d.shape[0]
    E = encoder_out_4d.shape[-1]

    # encoder_out = encoder_out.view(batch_size, -1, encoder_dim)
    encoder_out = encoder_out_4d.reshape(B, -1, E)
    # num_pixels = encoder_out.size(-1)   <- reference quirk, unused; reproduced as-is.

    # caption_lengths, sort_ind = caption_lengths.squeeze(1).sort(dim=0, descending=False)
    cl = caption_lengths[:, 0]
    sort_ind = jnp.argsort(cl)
    caption_lengths_sorted = cl[sort_ind]
    encoder_out = encoder_out[sort_ind]
    # Reference quirk preserved verbatim: the reference reassigns encoder_out on
    # the previous line, so this equals original_encoder_out[sort_ind][sort_ind]
    # (the reference gathers encoder_out, not encoded_captions).
    encoded_captions_sorted = encoder_out[sort_ind]

    # TODO(synk): reference forward() is truncated here (no LSTMCell decode loop,
    # no fc/embedding/dropout use, no return); below we run init_hidden_state and
    # Attention.foward as a single fused Pallas kernel.
    h, c, awe, alpha = init_hidden_and_attention(encoder_out, params)

    return (encoder_out, encoded_captions_sorted, caption_lengths_sorted,
            sort_ind, h, c, awe, alpha)


# ----------------------------- parameters ----------------------------------

def make_params(key, attention_dim, embed_dim, decoder_dim, vocab_size, encoder_dim):
    ks = jax.random.split(key, 8)

    def linear(k, out_f, in_f):
        bound = 1.0 / math.sqrt(in_f)
        kw, kb = jax.random.split(k)
        w = jax.random.uniform(kw, (out_f, in_f), jnp.float32, -bound, bound)
        b = jax.random.uniform(kb, (1, out_f), jnp.float32, -bound, bound)
        return w, b

    p = {}
    p['enc_att_w'], p['enc_att_b'] = linear(ks[0], attention_dim, encoder_dim)
    p['dec_att_w'], p['dec_att_b'] = linear(ks[1], attention_dim, decoder_dim)
    p['full_att_w'], p['full_att_b'] = linear(ks[2], 1, attention_dim)
    p['init_h_w'], p['init_h_b'] = linear(ks[3], decoder_dim, encoder_dim)
    p['init_c_w'], p['init_c_b'] = linear(ks[4], decoder_dim, encoder_dim)
    p['f_beta_w'], p['f_beta_b'] = linear(ks[5], encoder_dim, decoder_dim)
    # init_weights(): fc uniform(-0.1, 0.1), fc bias 0, embedding uniform(-0.1, 0.1)
    p['fc_w'] = jax.random.uniform(ks[6], (vocab_size, decoder_dim), jnp.float32, -0.1, 0.1)
    p['fc_b'] = jnp.zeros((1, vocab_size), jnp.float32)
    p['embedding'] = jax.random.uniform(ks[7], (vocab_size, embed_dim), jnp.float32, -0.1, 0.1)
    return p


# --------------------------------- main -------------------------------------

if __name__ == "__main__":
    B, enc_size = 2, 4
    attention_dim, embed_dim, decoder_dim = 32, 16, 32
    vocab_size, encoder_dim = 50, 64
    max_cap_len = 8

    key = jax.random.PRNGKey(0)
    k1, k2, k3, kp = jax.random.split(key, 4)

    encoder_out = jax.random.normal(k1, (B, enc_size, enc_size, encoder_dim), jnp.float32)
    encoded_captions = jax.random.randint(k2, (B, max_cap_len), 0, vocab_size, jnp.int32)
    caption_lengths = jax.random.randint(k3, (B, 1), 1, max_cap_len + 1, jnp.int32)

    params = make_params(kp, attention_dim, embed_dim, decoder_dim, vocab_size, encoder_dim)

    outs = decoder_forward(params, encoder_out, encoded_captions, caption_lengths)
    jax.block_until_ready(outs)
    print("KERNEL_OK")
</pallas_src>

<mosaic_0001>
module attributes {stable_mosaic.version = 11 : i64} {
  func.func @_fused_init_attention_kernel(%arg0: i32, %arg1: memref<2x16x64xbf16, #tpu.memory_space<vmem>>, %arg2: memref<64x256xbf16, #tpu.memory_space<vmem>>, %arg3: memref<1x256xf32, #tpu.memory_space<vmem>>, %arg4: memref<64x128xbf16, #tpu.memory_space<vmem>>, %arg5: memref<1x128xf32, #tpu.memory_space<vmem>>, %arg6: memref<128x128xbf16, #tpu.memory_space<vmem>>, %arg7: memref<1x128xf32, #tpu.memory_space<vmem>>, %arg8: memref<1x128xf32, #tpu.memory_space<vmem>>, %arg9: memref<2x256xf32, #tpu.memory_space<vmem>>, %arg10: memref<2x64xf32, #tpu.memory_space<vmem>>, %arg11: memref<2x16xf32, #tpu.memory_space<vmem>>) attributes {dimension_semantics = [#tpu.dimension_semantics<parallel>], iteration_bounds = array<i64: 1>, scalar_prefetch = 0 : i64, scratch_operands = 0 : i64, tpu.core_type = #tpu.core_type<tc>, window_params = [{transform_indices = @transform_0, window_bounds = array<i64: 2, 16, 64>}, {pipeline_mode = #tpu.pipeline_mode<synchronous>, transform_indices = @transform_1, window_bounds = array<i64: 64, 256>}, {pipeline_mode = #tpu.pipeline_mode<synchronous>, transform_indices = @transform_2, window_bounds = array<i64: 1, 256>}, {pipeline_mode = #tpu.pipeline_mode<synchronous>, transform_indices = @transform_3, window_bounds = array<i64: 64, 128>}, {pipeline_mode = #tpu.pipeline_mode<synchronous>, transform_indices = @transform_4, window_bounds = array<i64: 1, 128>}, {pipeline_mode = #tpu.pipeline_mode<synchronous>, transform_indices = @transform_5, window_bounds = array<i64: 128, 128>}, {pipeline_mode = #tpu.pipeline_mode<synchronous>, transform_indices = @transform_6, window_bounds = array<i64: 1, 128>}, {pipeline_mode = #tpu.pipeline_mode<synchronous>, transform_indices = @transform_7, window_bounds = array<i64: 1, 128>}, {transform_indices = @transform_8, window_bounds = array<i64: 2, 256>}, {transform_indices = @transform_9, window_bounds = array<i64: 2, 64>}, {transform_indices = @transform_10, window_bounds = array<i64: 2, 16>}]} {
    %c0 = arith.constant 0 : index
    %c0_0 = arith.constant 0 : index
    %c0_1 = arith.constant 0 : index
    %0 = vector.load %arg1[%c0, %c0_0, %c0_1] : memref<2x16x64xbf16, #tpu.memory_space<vmem>>, vector<2x16x64xbf16>
    %1 = arith.extf %0 : vector<2x16x64xbf16> to vector<2x16x64xf32>
    %cst = arith.constant dense<0.000000e+00> : vector<2x64xf32>
    %2 = vector.multi_reduction <add>, %1, %cst [1] : vector<2x16x64xf32> to vector<2x64xf32>
    %cst_2 = arith.constant 6.250000e-02 : f32
    %3 = vector.broadcast %cst_2 : f32 to vector<2x64xf32>
    %4 = arith.mulf %2, %3 : vector<2x64xf32>
    %5 = arith.truncf %4 : vector<2x64xf32> to vector<2x64xbf16>
    %c0_3 = arith.constant 0 : index
    %c0_4 = arith.constant 0 : index
    %6 = vector.load %arg2[%c0_3, %c0_4] : memref<64x256xbf16, #tpu.memory_space<vmem>>, vector<64x256xbf16>
    %cst_5 = arith.constant dense<0.000000e+00> : vector<2x256xf32>
    %7 = tpu.matmul %5, %6, %cst_5 {dimension_numbers = #tpu.dot_dimension_numbers<[1], [0], [0], [1], [0, 0, 1, 1], [], []>} : vector<2x64xbf16>, vector<64x256xbf16>, vector<2x256xf32> -> vector<2x256xf32>
    %c0_6 = arith.constant 0 : index
    %c0_7 = arith.constant 0 : index
    %8 = vector.load %arg3[%c0_6, %c0_7] : memref<1x256xf32, #tpu.memory_space<vmem>>, vector<1x256xf32>
    %9 = vector.broadcast %8 : vector<1x256xf32> to vector<2x256xf32>
    %10 = arith.addf %7, %9 : vector<2x256xf32>
    %c0_8 = arith.constant 0 : index
    %c0_9 = arith.constant 0 : index
    %11 = vector.load %arg9[%c0_8, %c0_9] : memref<2x256xf32, #tpu.memory_space<vmem>>, vector<2x256xf32>
    tpu.vector_store %arg9[%c0_8, %c0_9], %10 {strides = array<i32>} : memref<2x256xf32, #tpu.memory_space<vmem>>, vector<2x256xf32>,
    %12 = vector.extract_strided_slice %10 {offsets = [0, 0], sizes = [2, 128], strides = [1, 1]} : vector<2x256xf32> to vector<2x128xf32>
    %13 = vector.shape_cast %0 : vector<2x16x64xbf16> to vector<32x64xbf16>
    %c0_10 = arith.constant 0 : index
    %c0_11 = arith.constant 0 : index
    %14 = vector.load %arg4[%c0_10, %c0_11] : memref<64x128xbf16, #tpu.memory_space<vmem>>, vector<64x128xbf16>
    %cst_12 = arith.constant dense<0.000000e+00> : vector<32x128xf32>
    %15 = tpu.matmul %13, %14, %cst_12 {dimension_numbers = #tpu.dot_dimension_numbers<[1], [0], [0], [1], [0, 0, 1, 1], [], []>} : vector<32x64xbf16>, vector<64x128xbf16>, vector<32x128xf32> -> vector<32x128xf32>
    %c0_13 = arith.constant 0 : index
    %c0_14 = arith.constant 0 : index
    %16 = vector.load %arg5[%c0_13, %c0_14] : memref<1x128xf32, #tpu.memory_space<vmem>>, vector<1x128xf32>
    %17 = vector.broadcast %16 : vector<1x128xf32> to vector<32x128xf32>
    %18 = arith.addf %15, %17 : vector<32x128xf32>
    %19 = vector.shape_cast %18 : vector<32x128xf32> to vector<2x16x128xf32>
    %20 = arith.truncf %12 : vector<2x128xf32> to vector<2x128xbf16>
    %c0_15 = arith.constant 0 : index
    %c0_16 = arith.constant 0 : index
    %21 = vector.load %arg6[%c0_15, %c0_16] : memref<128x128xbf16, #tpu.memory_space<vmem>>, vector<128x128xbf16>
    %cst_17 = arith.constant dense<0.000000e+00> : vector<2x128xf32>
    %22 = tpu.matmul %20, %21, %cst_17 {dimension_numbers = #tpu.dot_dimension_numbers<[1], [0], [0], [1], [0, 0, 1, 1], [], []>} : vector<2x128xbf16>, vector<128x128xbf16>, vector<2x128xf32> -> vector<2x128xf32>
    %c0_18 = arith.constant 0 : index
    %c0_19 = arith.constant 0 : index
    %23 = vector.load %arg7[%c0_18, %c0_19] : memref<1x128xf32, #tpu.memory_space<vmem>>, vector<1x128xf32>
    %24 = vector.broadcast %23 : vector<1x128xf32> to vector<2x128xf32>
    %25 = arith.addf %22, %24 : vector<2x128xf32>
    %26 = vector.shape_cast %25 : vector<2x128xf32> to vector<2x1x128xf32>
    %27 = vector.broadcast %26 : vector<2x1x128xf32> to vector<2x16x128xf32>
    %28 = arith.addf %19, %27 : vector<2x16x128xf32>
    %cst_20 = arith.constant 0.000000e+00 : f32
    %29 = vector.broadcast %cst_20 : f32 to vector<2x16x128xf32>
    %30 = arith.maximumf %28, %29 : vector<2x16x128xf32>
    %c0_21 = arith.constant 0 : index
    %c0_22 = arith.constant 0 : index
    %31 = vector.load %arg8[%c0_21, %c0_22] : memref<1x128xf32, #tpu.memory_space<vmem>>, vector<1x128xf32>
    %32 = vector.shape_cast %31 : vector<1x128xf32> to vector<1x1x128xf32>
    %33 = vector.broadcast %32 : vector<1x1x128xf32> to vector<2x16x128xf32>
    %34 = arith.mulf %30, %33 : vector<2x16x128xf32>
    %cst_23 = arith.constant dense<0.000000e+00> : vector<2x16xf32>
    %35 = vector.multi_reduction <add>, %34, %cst_23 [2] : vector<2x16x128xf32> to vector<2x16xf32>
    %cst_24 = arith.constant dense<0xFF800000> : vector<2xf32>
    %36 = vector.multi_reduction <maximumf>, %35, %cst_24 [1] : vector<2x16xf32> to vector<2xf32>
    %37 = vector.shape_cast %36 : vector<2xf32> to vector<2x1xf32>
    %38 = vector.broadcast %37 : vector<2x1xf32> to vector<2x16xf32>
    %39 = arith.subf %35, %38 : vector<2x16xf32>
    %40 = math.exp %39 : vector<2x16xf32>
    %cst_25 = arith.constant dense<0.000000e+00> : vector<2xf32>
    %41 = vector.multi_reduction <add>, %40, %cst_25 [1] : vector<2x16xf32> to vector<2xf32>
    %42 = vector.shape_cast %41 : vector<2xf32> to vector<2x1xf32>
    %43 = tpu.reciprocal %42 {approx = true} : vector<2x1xf32> -> vector<2x1xf32>
    %44 = vector.broadcast %43 : vector<2x1xf32> to vector<2x16xf32>
    %45 = arith.mulf %40, %44 : vector<2x16xf32>
    %c0_26 = arith.constant 0 : index
    %c0_27 = arith.constant 0 : index
    %46 = vector.load %arg11[%c0_26, %c0_27] : memref<2x16xf32, #tpu.memory_space<vmem>>, vector<2x16xf32>
    tpu.vector_store %arg11[%c0_26, %c0_27], %45 {strides = array<i32>} : memref<2x16xf32, #tpu.memory_space<vmem>>, vector<2x16xf32>,
    %47 = vector.shape_cast %45 : vector<2x16xf32> to vector<2x16x1xf32>
    %48 = vector.broadcast %47 : vector<2x16x1xf32> to vector<2x16x64xf32>
    %49 = arith.mulf %1, %48 : vector<2x16x64xf32>
    %cst_28 = arith.constant dense<0.000000e+00> : vector<2x64xf32>
    %50 = vector.multi_reduction <add>, %49, %cst_28 [1] : vector<2x16x64xf32> to vector<2x64xf32>
    %c0_29 = arith.constant 0 : index
    %c0_30 = arith.constant 0 : index
    %51 = vector.load %arg10[%c0_29, %c0_30] : memref<2x64xf32, #tpu.memory_space<vmem>>, vector<2x64xf32>
    tpu.vector_store %arg10[%c0_29, %c0_30], %50 {strides = array<i32>} : memref<2x64xf32, #tpu.memory_space<vmem>>, vector<2x64xf32>,
    return
  }
  func.func @transform_0(%arg0: i32) -> (i32, i32, i32) {
    %c0_i32 = arith.constant 0 : i32
    %c0_i32_0 = arith.constant 0 : i32
    %c0_i32_1 = arith.constant 0 : i32
    return %arg0, %c0_i32, %c0_i32_0 : i32, i32, i32
  }
  func.func @transform_1(%arg0: i32) -> (i32, i32) {
    %c0_i32 = arith.constant 0 : i32
    %c0_i32_0 = arith.constant 0 : i32
    %c0_i32_1 = arith.constant 0 : i32
    return %c0_i32, %c0_i32_0 : i32, i32
  }
  func.func @transform_2(%arg0: i32) -> (i32, i32) {
    %c0_i32 = arith.constant 0 : i32
    %c0_i32_0 = arith.constant 0 : i32
    %c0_i32_1 = arith.constant 0 : i32
    return %c0_i32, %c0_i32_0 : i32, i32
  }
  func.func @transform_3(%arg0: i32) -> (i32, i32) {
    %c0_i32 = arith.constant 0 : i32
    %c0_i32_0 = arith.constant 0 : i32
    %c0_i32_1 = arith.constant 0 : i32
    return %c0_i32, %c0_i32_0 : i32, i32
  }
  func.func @transform_4(%arg0: i32) -> (i32, i32) {
    %c0_i32 = arith.constant 0 : i32
    %c0_i32_0 = arith.constant 0 : i32
    %c0_i32_1 = arith.constant 0 : i32
    return %c0_i32, %c0_i32_0 : i32, i32
  }
  func.func @transform_5(%arg0: i32) -> (i32, i32) {
    %c0_i32 = arith.constant 0 : i32
    %c0_i32_0 = arith.constant 0 : i32
    %c0_i32_1 = arith.constant 0 : i32
    return %c0_i32, %c0_i32_0 : i32, i32
  }
  func.func @transform_6(%arg0: i32) -> (i32, i32) {
    %c0_i32 = arith.constant 0 : i32
    %c0_i32_0 = arith.constant 0 : i32
    %c0_i32_1 = arith.constant 0 : i32
    return %c0_i32, %c0_i32_0 : i32, i32
  }
  func.func @transform_7(%arg0: i32) -> (i32, i32) {
    %c0_i32 = arith.constant 0 : i32
    %c0_i32_0 = arith.constant 0 : i32
    %c0_i32_1 = arith.constant 0 : i32
    return %c0_i32, %c0_i32_0 : i32, i32
  }
  func.func @transform_8(%arg0: i32) -> (i32, i32) {
    %c0_i32 = arith.constant 0 : i32
    %c0_i32_0 = arith.constant 0 : i32
    return %arg0, %c0_i32 : i32, i32
  }
  func.func @transform_9(%arg0: i32) -> (i32, i32) {
    %c0_i32 = arith.constant 0 : i32
    %c0_i32_0 = arith.constant 0 : i32
    return %arg0, %c0_i32 : i32, i32
  }
  func.func @transform_10(%arg0: i32) -> (i32, i32) {
    %c0_i32 = arith.constant 0 : i32
    %c0_i32_0 = arith.constant 0 : i32
    return %arg0, %c0_i32 : i32, i32
  }
}

module attributes {stable_mosaic.version = 11 : i64} {
  func.func @_fused_init_attention_kernel(%arg0: i32, %arg1: memref<2x16x64xbf16, #tpu.memory_space<vmem>>, %arg2: memref<64x256xbf16, #tpu.memory_space<vmem>>, %arg3: memref<1x256xf32, #tpu.memory_space<vmem>>, %arg4: memref<64x128xbf16, #tpu.memory_space<vmem>>, %arg5: memref<1x128xf32, #tpu.memory_space<vmem>>, %arg6: memref<128x128xbf16, #tpu.memory_space<vmem>>, %arg7: memref<1x128xf32, #tpu.memory_space<vmem>>, %arg8: memref<1x128xf32, #tpu.memory_space<vmem>>, %arg9: memref<2x256xf32, #tpu.memory_space<vmem>>, %arg10: memref<2x64xf32, #tpu.memory_space<vmem>>, %arg11: memref<2x16xf32, #tpu.memory_space<vmem>>) attributes {dimension_semantics = [#tpu.dimension_semantics<parallel>], iteration_bounds = array<i64: 1>, scalar_prefetch = 0 : i64, scratch_operands = 0 : i64, tpu.core_type = #tpu.core_type<tc>, window_params = [{transform_indices = @transform_0, window_bounds = array<i64: 2, 16, 64>}, {pipeline_mode = #tpu.pipeline_mode<synchronous>, transform_indices = @transform_1, window_bounds = array<i64: 64, 256>}, {pipeline_mode = #tpu.pipeline_mode<synchronous>, transform_indices = @transform_2, window_bounds = array<i64: 1, 256>}, {pipeline_mode = #tpu.pipeline_mode<synchronous>, transform_indices = @transform_3, window_bounds = array<i64: 64, 128>}, {pipeline_mode = #tpu.pipeline_mode<synchronous>, transform_indices = @transform_4, window_bounds = array<i64: 1, 128>}, {pipeline_mode = #tpu.pipeline_mode<synchronous>, transform_indices = @transform_5, window_bounds = array<i64: 128, 128>}, {pipeline_mode = #tpu.pipeline_mode<synchronous>, transform_indices = @transform_6, window_bounds = array<i64: 1, 128>}, {pipeline_mode = #tpu.pipeline_mode<synchronous>, transform_indices = @transform_7, window_bounds = array<i64: 1, 128>}, {transform_indices = @transform_8, window_bounds = array<i64: 2, 256>}, {transform_indices = @transform_9, window_bounds = array<i64: 2, 64>}, {transform_indices = @transform_10, window_bounds = array<i64: 2, 16>}]} {
    %c0 = arith.constant 0 : index
    %c0_0 = arith.constant 0 : index
    %c0_1 = arith.constant 0 : index
    %0 = vector.load %arg1[%c0, %c0_0, %c0_1] : memref<2x16x64xbf16, #tpu.memory_space<vmem>>, vector<2x16x64xbf16>
    %1 = arith.extf %0 : vector<2x16x64xbf16> to vector<2x16x64xf32>
    %cst = arith.constant dense<0.000000e+00> : vector<2x64xf32>
    %2 = vector.multi_reduction <add>, %1, %cst [1] : vector<2x16x64xf32> to vector<2x64xf32>
    %cst_2 = arith.constant 6.250000e-02 : f32
    %3 = vector.broadcast %cst_2 : f32 to vector<2x64xf32>
    %4 = arith.mulf %2, %3 : vector<2x64xf32>
    %5 = arith.truncf %4 : vector<2x64xf32> to vector<2x64xbf16>
    %c0_3 = arith.constant 0 : index
    %c0_4 = arith.constant 0 : index
    %6 = vector.load %arg2[%c0_3, %c0_4] : memref<64x256xbf16, #tpu.memory_space<vmem>>, vector<64x256xbf16>
    %cst_5 = arith.constant dense<0.000000e+00> : vector<2x256xf32>
    %7 = tpu.matmul %5, %6, %cst_5 {dimension_numbers = #tpu.dot_dimension_numbers<[1], [0], [0], [1], [0, 0, 1, 1], [], []>} : vector<2x64xbf16>, vector<64x256xbf16>, vector<2x256xf32> -> vector<2x256xf32>
    %c0_6 = arith.constant 0 : index
    %c0_7 = arith.constant 0 : index
    %8 = vector.load %arg3[%c0_6, %c0_7] : memref<1x256xf32, #tpu.memory_space<vmem>>, vector<1x256xf32>
    %9 = vector.broadcast %8 : vector<1x256xf32> to vector<2x256xf32>
    %10 = arith.addf %7, %9 : vector<2x256xf32>
    %c0_8 = arith.constant 0 : index
    %c0_9 = arith.constant 0 : index
    %11 = vector.load %arg9[%c0_8, %c0_9] : memref<2x256xf32, #tpu.memory_space<vmem>>, vector<2x256xf32>
    tpu.vector_store %arg9[%c0_8, %c0_9], %10 {strides = array<i32>} : memref<2x256xf32, #tpu.memory_space<vmem>>, vector<2x256xf32>,
    %12 = vector.extract_strided_slice %10 {offsets = [0, 0], sizes = [2, 128], strides = [1, 1]} : vector<2x256xf32> to vector<2x128xf32>
    %13 = vector.shape_cast %0 : vector<2x16x64xbf16> to vector<32x64xbf16>
    %c0_10 = arith.constant 0 : index
    %c0_11 = arith.constant 0 : index
    %14 = vector.load %arg4[%c0_10, %c0_11] : memref<64x128xbf16, #tpu.memory_space<vmem>>, vector<64x128xbf16>
    %cst_12 = arith.constant dense<0.000000e+00> : vector<32x128xf32>
    %15 = tpu.matmul %13, %14, %cst_12 {dimension_numbers = #tpu.dot_dimension_numbers<[1], [0], [0], [1], [0, 0, 1, 1], [], []>} : vector<32x64xbf16>, vector<64x128xbf16>, vector<32x128xf32> -> vector<32x128xf32>
    %c0_13 = arith.constant 0 : index
    %c0_14 = arith.constant 0 : index
    %16 = vector.load %arg5[%c0_13, %c0_14] : memref<1x128xf32, #tpu.memory_space<vmem>>, vector<1x128xf32>
    %17 = vector.broadcast %16 : vector<1x128xf32> to vector<32x128xf32>
    %18 = arith.addf %15, %17 : vector<32x128xf32>
    %19 = vector.shape_cast %18 : vector<32x128xf32> to vector<2x16x128xf32>
    %20 = arith.truncf %12 : vector<2x128xf32> to vector<2x128xbf16>
    %c0_15 = arith.constant 0 : index
    %c0_16 = arith.constant 0 : index
    %21 = vector.load %arg6[%c0_15, %c0_16] : memref<128x128xbf16, #tpu.memory_space<vmem>>, vector<128x128xbf16>
    %cst_17 = arith.constant dense<0.000000e+00> : vector<2x128xf32>
    %22 = tpu.matmul %20, %21, %cst_17 {dimension_numbers = #tpu.dot_dimension_numbers<[1], [0], [0], [1], [0, 0, 1, 1], [], []>} : vector<2x128xbf16>, vector<128x128xbf16>, vector<2x128xf32> -> vector<2x128xf32>
    %c0_18 = arith.constant 0 : index
    %c0_19 = arith.constant 0 : index
    %23 = vector.load %arg7[%c0_18, %c0_19] : memref<1x128xf32, #tpu.memory_space<vmem>>, vector<1x128xf32>
    %24 = vector.broadcast %23 : vector<1x128xf32> to vector<2x128xf32>
    %25 = arith.addf %22, %24 : vector<2x128xf32>
    %26 = vector.shape_cast %25 : vector<2x128xf32> to vector<2x1x128xf32>
    %27 = vector.broadcast %26 : vector<2x1x128xf32> to vector<2x16x128xf32>
    %28 = arith.addf %19, %27 : vector<2x16x128xf32>
    %cst_20 = arith.constant 0.000000e+00 : f32
    %29 = vector.broadcast %cst_20 : f32 to vector<2x16x128xf32>
    %30 = arith.maximumf %28, %29 : vector<2x16x128xf32>
    %c0_21 = arith.constant 0 : index
    %c0_22 = arith.constant 0 : index
    %31 = vector.load %arg8[%c0_21, %c0_22] : memref<1x128xf32, #tpu.memory_space<vmem>>, vector<1x128xf32>
    %32 = vector.shape_cast %31 : vector<1x128xf32> to vector<1x1x128xf32>
    %33 = vector.broadcast %32 : vector<1x1x128xf32> to vector<2x16x128xf32>
    %34 = arith.mulf %30, %33 : vector<2x16x128xf32>
    %cst_23 = arith.constant dense<0.000000e+00> : vector<2x16xf32>
    %35 = vector.multi_reduction <add>, %34, %cst_23 [2] : vector<2x16x128xf32> to vector<2x16xf32>
    %cst_24 = arith.constant dense<0xFF800000> : vector<2xf32>
    %36 = vector.multi_reduction <maximumf>, %35, %cst_24 [1] : vector<2x16xf32> to vector<2xf32>
    %37 = vector.shape_cast %36 : vector<2xf32> to vector<2x1xf32>
    %38 = vector.broadcast %37 : vector<2x1xf32> to vector<2x16xf32>
    %39 = arith.subf %35, %38 : vector<2x16xf32>
    %40 = math.exp %39 : vector<2x16xf32>
    %cst_25 = arith.constant dense<0.000000e+00> : vector<2xf32>
    %41 = vector.multi_reduction <add>, %40, %cst_25 [1] : vector<2x16xf32> to vector<2xf32>
    %42 = vector.shape_cast %41 : vector<2xf32> to vector<2x1xf32>
    %43 = tpu.reciprocal %42 {approx = true} : vector<2x1xf32> -> vector<2x1xf32>
    %44 = vector.broadcast %43 : vector<2x1xf32> to vector<2x16xf32>
    %45 = arith.mulf %40, %44 : vector<2x16xf32>
    %c0_26 = arith.constant 0 : index
    %c0_27 = arith.constant 0 : index
    %46 = vector.load %arg11[%c0_26, %c0_27] : memref<2x16xf32, #tpu.memory_space<vmem>>, vector<2x16xf32>
    tpu.vector_store %arg11[%c0_26, %c0_27], %45 {strides = array<i32>} : memref<2x16xf32, #tpu.memory_space<vmem>>, vector<2x16xf32>,
    %47 = vector.shape_cast %45 : vector<2x16xf32> to vector<2x16x1xf32>
    %48 = vector.broadcast %47 : vector<2x16x1xf32> to vector<2x16x64xf32>
    %49 = arith.mulf %1, %48 : vector<2x16x64xf32>
    %cst_28 = arith.constant dense<0.000000e+00> : vector<2x64xf32>
    %50 = vector.multi_reduction <add>, %49, %cst_28 [1] : vector<2x16x64xf32> to vector<2x64xf32>
    %c0_29 = arith.constant 0 : index
    %c0_30 = arith.constant 0 : index
    %51 = vector.load %arg10[%c0_29, %c0_30] : memref<2x64xf32, #tpu.memory_space<vmem>>, vector<2x64xf32>
    tpu.vector_store %arg10[%c0_29, %c0_30], %50 {strides = array<i32>} : memref<2x64xf32, #tpu.memory_space<vmem>>, vector<2x64xf32>,
    return
  }
  func.func @transform_0(%arg0: i32) -> (i32, i32, i32) {
    %c0_i32 = arith.constant 0 : i32
    %c0_i32_0 = arith.constant 0 : i32
    %c0_i32_1 = arith.constant 0 : i32
    return %arg0, %c0_i32, %c0_i32_0 : i32, i32, i32
  }
  func.func @transform_1(%arg0: i32) -> (i32, i32) {
    %c0_i32 = arith.constant 0 : i32
    %c0_i32_0 = arith.constant 0 : i32
    %c0_i32_1 = arith.constant 0 : i32
    return %c0_i32, %c0_i32_0 : i32, i32
  }
  func.func @transform_2(%arg0: i32) -> (i32, i32) {
    %c0_i32 = arith.constant 0 : i32
    %c0_i32_0 = arith.constant 0 : i32
    %c0_i32_1 = arith.constant 0 : i32
    return %c0_i32, %c0_i32_0 : i32, i32
  }
  func.func @transform_3(%arg0: i32) -> (i32, i32) {
    %c0_i32 = arith.constant 0 : i32
    %c0_i32_0 = arith.constant 0 : i32
    %c0_i32_1 = arith.constant 0 : i32
    return %c0_i32, %c0_i32_0 : i32, i32
  }
  func.func @transform_4(%arg0: i32) -> (i32, i32) {
    %c0_i32 = arith.constant 0 : i32
    %c0_i32_0 = arith.constant 0 : i32
    %c0_i32_1 = arith.constant 0 : i32
    return %c0_i32, %c0_i32_0 : i32, i32
  }
  func.func @transform_5(%arg0: i32) -> (i32, i32) {
    %c0_i32 = arith.constant 0 : i32
    %c0_i32_0 = arith.constant 0 : i32
    %c0_i32_1 = arith.constant 0 : i32
    return %c0_i32, %c0_i32_0 : i32, i32
  }
  func.func @transform_6(%arg0: i32) -> (i32, i32) {
    %c0_i32 = arith.constant 0 : i32
    %c0_i32_0 = arith.constant 0 : i32
    %c0_i32_1 = arith.constant 0 : i32
    return %c0_i32, %c0_i32_0 : i32, i32
  }
  func.func @transform_7(%arg0: i32) -> (i32, i32) {
    %c0_i32 = arith.constant 0 : i32
    %c0_i32_0 = arith.constant 0 : i32
    %c0_i32_1 = arith.constant 0 : i32
    return %c0_i32, %c0_i32_0 : i32, i32
  }
  func.func @transform_8(%arg0: i32) -> (i32, i32) {
    %c0_i32 = arith.constant 0 : i32
    %c0_i32_0 = arith.constant 0 : i32
    return %arg0, %c0_i32 : i32, i32
  }
  func.func @transform_9(%arg0: i32) -> (i32, i32) {
    %c0_i32 = arith.constant 0 : i32
    %c0_i32_0 = arith.constant 0 : i32
    return %arg0, %c0_i32 : i32, i32
  }
  func.func @transform_10(%arg0: i32) -> (i32, i32) {
    %c0_i32 = arith.constant 0 : i32
    %c0_i32_0 = arith.constant 0 : i32
    return %arg0, %c0_i32 : i32, i32
  }
}

</mosaic_0001>

<llo_original>
// kernel: tpu_custom_call.1
$region0: #{tpu_custom_call.1}
  #allocation0 [shape = 'u32[]', space=smem, size = 0x4, offset = 0x4, fixed_abs, tag = 'smem constant byte address 0x4 - core index']
  #allocation1 [shape = 'u32[144,128]{1,0:T(1,128)}', space=vmem, size = 0x12000, scoped, tag = 'internal scratch']
  %s0 = inlined_call_operand.hbm [shape: bf16[2,16,64], index: 0, kind: input, shape index: {}]
  %s1 = inlined_call_operand.hbm [shape: bf16[64,256], index: 1, kind: input, shape index: {}]
  %s2 = inlined_call_operand.vmem [shape: f32[1,256], index: 2, kind: input, shape index: {}]
  %s3 = inlined_call_operand.hbm [shape: bf16[64,128], index: 3, kind: input, shape index: {}]
  %s4 = inlined_call_operand.vmem [shape: f32[1,128], index: 4, kind: input, shape index: {}]
  %s5 = inlined_call_operand.hbm [shape: bf16[128,128], index: 5, kind: input, shape index: {}]
  %s6 = inlined_call_operand.vmem [shape: f32[1,128], index: 6, kind: input, shape index: {}]
  %s7 = inlined_call_operand.vmem [shape: f32[1,128], index: 7, kind: input, shape index: {}]
  %s8 = inlined_call_operand.hbm [shape: f32[2,256], index: 8, kind: output, shape index: {0}]
  %s9 = inlined_call_operand.hbm [shape: f32[2,64], index: 9, kind: output, shape index: {1}]
  %s10 = inlined_call_operand.hbm [shape: f32[2,16], index: 10, kind: output, shape index: {2}]
  %11 = xla_tuple %s8, %s9, %s10
  %s12 = sld [smem:[#allocation0]]
  $region74: #{tpu_custom_call.1} parent=0
    _
  %s14 = ssub.s32 1, %s12
  %s15 = scalar_select 0, %s14, %s12
  $region1: #{tpu_custom_call.1} parent=0
    #allocation2 [shape = 'u8[8192]{0}', space=vmem, size = 0x2000, scoped, tag = 'input window, operand 0, single buffered']
    #allocation3 [shape = 's32[1]{0}', space=sflag, size = 0x4, scoped, tag = 'scoped memory for tpu_custom_call.1']
    #allocation4 [shape = 's32[1]{0}', space=sflag, size = 0x4, scoped, tag = 'scoped memory for tpu_custom_call.1']
    #allocation5 [shape = 'u8[32768]{0}', space=vmem, size = 0x8000, scoped, tag = 'input window, operand 1, single buffered']
    #allocation6 [shape = 's32[1]{0}', space=sflag, size = 0x4, scoped, tag = 'scoped memory for tpu_custom_call.1']
    #allocation7 [shape = 'u8[16384]{0}', space=vmem, size = 0x4000, scoped, tag = 'input window, operand 3, single buffered']
    #allocation8 [shape = 'u8[32768]{0}', space=vmem, size = 0x8000, scoped, tag = 'input window, operand 5, single buffered']
    #allocation9 [shape = 's32[1]{0}', space=sflag, size = 0x4, scoped, tag = 'scoped memory for tpu_custom_call.1']
    #allocation10 [shape = 'u8[2048]{0}', space=vmem, size = 0x800, scoped, tag = 'output window, operand 0, single buffered']
    #allocation11 [shape = 'u8[1024]{0}', space=vmem, size = 0x400, scoped, tag = 'output window, operand 1, single buffered']
    #allocation12 [shape = 's32[1]{0}', space=sflag, size = 0x4, scoped, tag = 'scoped memory for tpu_custom_call.1']
    #allocation13 [shape = 'u8[1024]{0}', space=vmem, size = 0x400, scoped, tag = 'output window, operand 2, single buffered']
    %16 = vsyncpa [#allocation3], 0
    %17 = vsyncpa [#allocation6], 0
    %18 = vsyncpa [#allocation9], 0
    %19 = vsyncpa [#allocation4], 0
    %20 = vsyncpa [#allocation12], 0
    // Predicated region
    $region2: #{tpu_custom_call.1} parent=1 // pred_check
      _
    $region3: #{tpu_custom_call.1} parent=1 // pred_check_branch
      %22 = sbr.rel (0) target = $region5
    $region4: #{tpu_custom_call.1} parent=1 // pred_region
      %s24 = ssub.s32 256, 256
      %25 = vsyncadd [#allocation3], %s24
      %s26 = sshll.u32 [#allocation2], 4
      %s27 = int_to_ptr.vmem [resolvable:$true] %s26
      %32 = dma.hbm_to_vmem [thread:$0]  %s0, 256, %s27, [#allocation3], 64, 64, 4
    $region5: #{tpu_custom_call.1} parent=1 // pred_fallthru
      _
    // Predicated region
    $region6: #{tpu_custom_call.1} parent=1 // pred_check
      _
    $region7: #{tpu_custom_call.1} parent=1 // pred_check_branch
      %34 = sbr.rel (0) target = $region9
    $region8: #{tpu_custom_call.1} parent=1 // pred_region
      %s36 = ssub.s32 1024, 1024
      %37 = vsyncadd [#allocation6], %s36
      %s38 = sshll.u32 [#allocation5], 4
      %s39 = int_to_ptr.vmem [resolvable:$true] %s38
      %44 = dma.hbm_to_vmem [thread:$0]  %s1, 1024, %s39, [#allocation6], 128, 128, 8
    $region9: #{tpu_custom_call.1} parent=1 // pred_fallthru
      _
    // Predicated region
    $region10: #{tpu_custom_call.1} parent=1 // pred_check
      _
    $region11: #{tpu_custom_call.1} parent=1 // pred_check_branch
      %46 = sbr.rel (0) target = $region13
    $region12: #{tpu_custom_call.1} parent=1 // pred_region
      _
    $region13: #{tpu_custom_call.1} parent=1 // pred_fallthru
      _
    // Predicated region
    $region14: #{tpu_custom_call.1} parent=1 // pred_check
      _
    $region15: #{tpu_custom_call.1} parent=1 // pred_check_branch
      %48 = sbr.rel (0) target = $region17
    $region16: #{tpu_custom_call.1} parent=1 // pred_region
      %s50 = ssub.s32 512, 512
      %51 = vsyncadd [#allocation6], %s50
      %s52 = sshll.u32 [#allocation7], 4
      %s53 = int_to_ptr.vmem [resolvable:$true] %s52
      %58 = dma.hbm_to_vmem [thread:$0]  %s3, 512, %s53, [#allocation6], 64, 64, 4
    $region17: #{tpu_custom_call.1} parent=1 // pred_fallthru
      _
    // Predicated region
    $region18: #{tpu_custom_call.1} parent=1 // pred_check
      _
    $region19: #{tpu_custom_call.1} parent=1 // pred_check_branch
      %60 = sbr.rel (0) target = $region21
    $region20: #{tpu_custom_call.1} parent=1 // pred_region
      _
    $region21: #{tpu_custom_call.1} parent=1 // pred_fallthru
      _
    // Predicated region
    $region22: #{tpu_custom_call.1} parent=1 // pred_check
      _
    $region23: #{tpu_custom_call.1} parent=1 // pred_check_branch
      %62 = sbr.rel (0) target = $region25
    $region24: #{tpu_custom_call.1} parent=1 // pred_region
      %s64 = ssub.s32 1024, 1024
      %65 = vsyncadd [#allocation9], %s64
      %s66 = sshll.u32 [#allocation8], 4
      %s67 = int_to_ptr.vmem [resolvable:$true] %s66
      %72 = dma.hbm_to_vmem [thread:$0]  %s5, 1024, %s67, [#allocation9], 64, 64, 4
    $region25: #{tpu_custom_call.1} parent=1 // pred_fallthru
      _
    // Predicated region
    $region26: #{tpu_custom_call.1} parent=1 // pred_check
      _
    $region27: #{tpu_custom_call.1} parent=1 // pred_check_branch
      %74 = sbr.rel (0) target = $region29
    $region28: #{tpu_custom_call.1} parent=1 // pred_region
      _
    $region29: #{tpu_custom_call.1} parent=1 // pred_fallthru
      _
    // Predicated region
    $region30: #{tpu_custom_call.1} parent=1 // pred_check
      _
    $region31: #{tpu_custom_call.1} parent=1 // pred_check_branch
      %76 = sbr.rel (0) target = $region33
    $region32: #{tpu_custom_call.1} parent=1 // pred_region
      _
    $region33: #{tpu_custom_call.1} parent=1 // pred_fallthru
      _
    // Predicated region
    $region34: #{tpu_custom_call.1} parent=1 // pred_check
      _
    $region35: #{tpu_custom_call.1} parent=1 // pred_check_branch
      %78 = sbr.rel (0) target = $region37
    $region36: #{tpu_custom_call.1} parent=1 // pred_region
      %79 = dma.done [#allocation3], 256
    $region37: #{tpu_custom_call.1} parent=1 // pred_fallthru
      _
    // Predicated region
    $region38: #{tpu_custom_call.1} parent=1 // pred_check
      _
    $region39: #{tpu_custom_call.1} parent=1 // pred_check_branch
      %81 = sbr.rel (0) target = $region41
    $region40: #{tpu_custom_call.1} parent=1 // pred_region
      %82 = dma.done [#allocation6], 1024
    $region41: #{tpu_custom_call.1} parent=1 // pred_fallthru
      _
    // Predicated region
    $region42: #{tpu_custom_call.1} parent=1 // pred_check
      _
    $region43: #{tpu_custom_call.1} parent=1 // pred_check_branch
      %84 = sbr.rel (0) target = $region45
    $region44: #{tpu_custom_call.1} parent=1 // pred_region
      %85 = dma.done [#allocation6], 512
    $region45: #{tpu_custom_call.1} parent=1 // pred_fallthru
      _
    // Predicated region
    $region46: #{tpu_custom_call.1} parent=1 // pred_check
      _
    $region47: #{tpu_custom_call.1} parent=1 // pred_check_branch
      %87 = sbr.rel (0) target = $region49
    $region48: #{tpu_custom_call.1} parent=1 // pred_region
      %88 = dma.done [#allocation9], 1024
    $region49: #{tpu_custom_call.1} parent=1 // pred_fallthru
      _
    %v90 = vld [vmem:[#allocation2] sm:$0xf]
    %v91 = vld [vmem:[#allocation2 + $0x4] sm:$0xf]
    %v92 = vld [vmem:[#allocation2 + $0x8] sm:$0xf]
    %v93 = vld [vmem:[#allocation2 + $0xc] sm:$0xf]
    %v94 = vunpack.c.l.bf16 %v90
    %v95 = vunpack.c.l.bf16 %v91
    %v96 = vunpack.c.l.bf16 %v92
    %v97 = vunpack.c.l.bf16 %v93
    %vm98 = vcmask 523264
    %v99 = vsel %vm98, %v94, 0.0
    %v100 = vsel %vm98, %v95, 0.0
    %v101 = vadd.f32 %v99, %v100
    %v102 = vrot.slane %v101, 4
    %v103 = vadd.f32 %v101, %v102
    %v104 = vrot.slane %v103, 2
    %v105 = vadd.f32 %v103, %v104
    %v106 = vrot.slane %v105, 1
    %v107 = vadd.f32 %v105, %v106
    %v108 = vsel %vm98, %v96, 0.0
    %v109 = vsel %vm98, %v97, 0.0
    %v110 = vadd.f32 %v108, %v109
    %v111 = vrot.slane %v110, 4
    %v112 = vadd.f32 %v110, %v111
    %v113 = vrot.slane %v112, 2
    %v114 = vadd.f32 %v112, %v113
    %v115 = vrot.slane %v114, 1
    %v116 = vadd.f32 %v114, %v115
    %v117 = vmul.f32 %v107, 0.0625
    %v118 = vmul.f32 %v116, 0.0625
    %v119 = vpack.c.bf16 %v117, %v117
    %v120 = vpack.c.bf16 %v118, %v118
    %v121 = vld [vmem:[#allocation5] sm:$0xff]
    %v122 = vld [vmem:[#allocation5 + $0x8] sm:$0xff]
    %v123 = vld [vmem:[#allocation5 + $0x10] sm:$0xff]
    %v124 = vld [vmem:[#allocation5 + $0x18] sm:$0xff]
    %v125 = vld [vmem:[#allocation5 + $0x20] sm:$0xff]
    %v126 = vld [vmem:[#allocation5 + $0x28] sm:$0xff]
    %v127 = vld [vmem:[#allocation5 + $0x30] sm:$0xff]
    %v128 = vld [vmem:[#allocation5 + $0x38] sm:$0xff]
    %v129 = vld [vmem:[%s2] sm:$0x3]
    %v131 = vlaneseq
    %v132 = vshrl.u32 %v131, 7
    %v133 = vsub.s32 0, %v132
    %v134 = vrot.slane %v129, %v133
    %v135 = vlaneseq
    %v136 = vshrl.u32 %v135, 7
    %v137 = vsub.s32 1, %v136
    %v138 = vrot.slane %v129, %v137
    %v143 = vunpack.c.l.b16 %v119
    %v144 = vunpack.c.l.b16 %v120
    %vm145 = vcmask 1041409
    %v146 = vsel %vm145, %v144, %v143
    %v147 = vpack.c.b16 %v146, %v146
    %v156 = vunpack.c.l.b16 %v121
    %v157 = vunpack.c.h.b16 %v121
    %v158 = vunpack.c.l.b16 %v122
    %v159 = vunpack.c.h.b16 %v122
    %v160 = vunpack.c.l.b16 %v123
    %v161 = vunpack.c.h.b16 %v123
    %v162 = vunpack.c.l.b16 %v124
    %v163 = vunpack.c.h.b16 %v124
    %v164 = vunpack.c.l.b16 %v125
    %v165 = vunpack.c.h.b16 %v125
    %v166 = vunpack.c.l.b16 %v126
    %v167 = vunpack.c.h.b16 %v126
    %v168 = vunpack.c.l.b16 %v127
    %v169 = vunpack.c.h.b16 %v127
    %v170 = vunpack.c.l.b16 %v128
    %v171 = vunpack.c.h.b16 %v128
    %v172 = vpack.c.b16 %v158, %v156
    %v173 = vpack.c.b16 %v159, %v157
    %v174 = vpack.c.b16 %v162, %v160
    %v175 = vpack.c.b16 %v163, %v161
    %v176 = vpack.c.b16 %v166, %v164
    %v177 = vpack.c.b16 %v167, %v165
    %v178 = vpack.c.b16 %v170, %v168
    %v179 = vpack.c.b16 %v171, %v169
    %v189 = vsel %vm98, %v147, 0
    %191 = vmatprep.subr.bf16.mxu0 0
    %192 = vmatpush1.bf16.msra.mxu0 0
    %193 = vmatprep.subr.bf16.mxu0 0
    %194 = vmatpush1.bf16.msra.mxu0 0
    %195 = vmatprep.subr.bf16.mxu0 0
    %196 = vmatpush1.bf16.msra.mxu0 0
    %197 = vmatprep.subr.bf16.mxu0 0
    %198 = vmatpush1.bf16.msra.mxu0 0
    %199 = vmatprep.subr.bf16.mxu0 %v179
    %200 = vmatpush1.bf16.msra.mxu0 %v178
    %201 = vmatprep.subr.bf16.mxu0 %v177
    %202 = vmatpush1.bf16.msra.mxu0 %v176
    %203 = vmatprep.subr.bf16.mxu0 %v175
    %204 = vmatpush1.bf16.msra.mxu0 %v174
    %205 = vmatprep.subr.bf16.mxu0 %v173
    %206 = vmatpush1.bf16.msra.mxu0 %v172
    %207 = vmatprep.subr.bf16.mxu0 0
    %208 = vmatpush2.bf16.msra.mxu0 0
    %209 = vmatprep.subr.bf16.mxu0 0
    %210 = vmatpush2.bf16.msra.mxu0 0
    %211 = vmatprep.subr.bf16.mxu0 0
    %212 = vmatpush2.bf16.msra.mxu0 0
    %213 = vmatprep.subr.bf16.mxu0 0
    %214 = vmatpush2.bf16.msra.mxu0 0
    %215 = vmatprep.subr.bf16.mxu0 0
    %216 = vmatpush2.bf16.msra.mxu0 0
    %217 = vmatprep.subr.bf16.mxu0 0
    %218 = vmatpush2.bf16.msra.mxu0 0
    %219 = vmatprep.subr.bf16.mxu0 0
    %220 = vmatpush2.bf16.msra.mxu0 0
    %221 = vmatprep.subr.bf16.mxu0 0
    %222 = vmatpush2.bf16.msra.mxu0 0
    %223 = vmatprep.mubr.bf16.mxu0 0
    %224 = vmatmul.mubr.bf16.gmra.mxu0 %v189
    %v225 = vpop.f32.mrf.mxu0
    %v226 = vadd.f32 %v134, %v225
    %v227 = vpop.f32.mrf.mxu0
    %v228 = vadd.f32 %v138, %v227
    %v229 = vpop.f32.mrf.mxu0
    %v230 = vpop.f32.mrf.mxu0
    %231 = vdwg.mxu0
    %v234 = vcombine.low %v226, %v228
    %v236 = vunpack.c.l.s4 1983009808
    %v237 = vunpack.c.0.s8 %v236
    %v238 = vlaneseq
    %v239 = vshrl.u32 %v238, 7
    %v240 = vsub.s32 %v237, %v239
    %v241 = vrot.slane %v234, %v240
    %243 = vst [vmem:[#allocation10] sm:$0xf] %v241
    %v244 = vld [vmem:[#allocation7] sm:$0xf]
    %v245 = vld [vmem:[#allocation7 + $0x4] sm:$0xf]
    %v246 = vld [vmem:[#allocation7 + $0x8] sm:$0xf]
    %v247 = vld [vmem:[#allocation7 + $0xc] sm:$0xf]
    %v248 = vld [vmem:[#allocation7 + $0x10] sm:$0xf]
    %v249 = vld [vmem:[#allocation7 + $0x14] sm:$0xf]
    %v250 = vld [vmem:[#allocation7 + $0x18] sm:$0xf]
    %v251 = vld [vmem:[#allocation7 + $0x1c] sm:$0xf]
    %v252 = vld [vmem:[%s4] sm:$0x1]
    %v254 = vlaneseq
    %v255 = vshrl.u32 %v254, 7
    %v256 = vsub.s32 0, %v255
    %v257 = vrot.slane %v252, %v256
    %v263 = vunpack.c.l.b16 %v90
    %v264 = vunpack.c.l.b16 %v91
    %v265 = vunpack.c.l.b16 %v92
    %v266 = vunpack.c.l.b16 %v93
    %v267 = vpack.c.b16 %v264, %v263
    %v268 = vpack.c.b16 %v266, %v265
    %v277 = vunpack.c.l.b16 %v244
    %v278 = vunpack.c.l.b16 %v245
    %v279 = vunpack.c.l.b16 %v246
    %v280 = vunpack.c.l.b16 %v247
    %v281 = vunpack.c.l.b16 %v248
    %v282 = vunpack.c.l.b16 %v249
    %v283 = vunpack.c.l.b16 %v250
    %v284 = vunpack.c.l.b16 %v251
    %v285 = vpack.c.b16 %v278, %v277
    %v286 = vpack.c.b16 %v280, %v279
    %v287 = vpack.c.b16 %v282, %v281
    %v288 = vpack.c.b16 %v284, %v283
    %v294 = vsel %vm98, %v267, 0
    %v297 = vsel %vm98, %v268, 0
    %299 = vmatprep.subr.bf16.mxu0 0
    %300 = vmatpush1.bf16.msra.mxu0 0
    %301 = vmatprep.subr.bf16.mxu0 0
    %302 = vmatpush1.bf16.msra.mxu0 0
    %303 = vmatprep.subr.bf16.mxu0 0
    %304 = vmatpush1.bf16.msra.mxu0 0
    %305 = vmatprep.subr.bf16.mxu0 0
    %306 = vmatpush1.bf16.msra.mxu0 0
    %307 = vmatprep.subr.bf16.mxu0 0
    %308 = vmatpush1.bf16.msra.mxu0 %v288
    %309 = vmatprep.subr.bf16.mxu0 0
    %310 = vmatpush1.bf16.msra.mxu0 %v287
    %311 = vmatprep.subr.bf16.mxu0 0
    %312 = vmatpush1.bf16.msra.mxu0 %v286
    %313 = vmatprep.subr.bf16.mxu0 0
    %314 = vmatpush1.bf16.msra.mxu0 %v285
    %315 = vmatprep.subr.bf16.mxu0 0
    %316 = vmatpush2.bf16.msra.mxu0 0
    %317 = vmatprep.subr.bf16.mxu0 0
    %318 = vmatpush2.bf16.msra.mxu0 0
    %319 = vmatprep.subr.bf16.mxu0 0
    %320 = vmatpush2.bf16.msra.mxu0 0
    %321 = vmatprep.subr.bf16.mxu0 0
    %322 = vmatpush2.bf16.msra.mxu0 0
    %323 = vmatprep.subr.bf16.mxu0 0
    %324 = vmatpush2.bf16.msra.mxu0 0
    %325 = vmatprep.subr.bf16.mxu0 0
    %326 = vmatpush2.bf16.msra.mxu0 0
    %327 = vmatprep.subr.bf16.mxu0 0
    %328 = vmatpush2.bf16.msra.mxu0 0
    %329 = vmatprep.subr.bf16.mxu0 0
    %330 = vmatpush2.bf16.msra.mxu0 0
    %331 = vmatprep.mubr.bf16.mxu0 0
    %332 = vmatmul.mubr.bf16.gmra.mxu0 %v294
    %v333 = vpop.f32.mrf.mxu0
    %v334 = vadd.f32 %v257, %v333
    %v335 = vpop.f32.mrf.mxu0
    %v336 = vpop.f32.mrf.mxu0
    %v337 = vadd.f32 %v257, %v336
    %v338 = vpop.f32.mrf.mxu0
    %339 = vmatprep.mubr.bf16.mxu0 0
    %340 = vmatmul.mubr.bf16.gmra.mxu0 %v297
    %v341 = vpop.f32.mrf.mxu0
    %v342 = vadd.f32 %v257, %v341
    %v343 = vpop.f32.mrf.mxu0
    %v344 = vpop.f32.mrf.mxu0
    %v345 = vadd.f32 %v257, %v344
    %v346 = vpop.f32.mrf.mxu0
    %347 = vdwg.mxu0
    %v348 = vpack.c.bf16 %v226, %v226
    %v349 = vld [vmem:[#allocation8] sm:$0xf]
    %v350 = vld [vmem:[#allocation8 + $0x4] sm:$0xf]
    %v351 = vld [vmem:[#allocation8 + $0x8] sm:$0xf]
    %v352 = vld [vmem:[#allocation8 + $0xc] sm:$0xf]
    %v353 = vld [vmem:[#allocation8 + $0x10] sm:$0xf]
    %v354 = vld [vmem:[#allocation8 + $0x14] sm:$0xf]
    %v355 = vld [vmem:[#allocation8 + $0x18] sm:$0xf]
    %v356 = vld [vmem:[#allocation8 + $0x1c] sm:$0xf]
    %v357 = vld [vmem:[#allocation8 + $0x20] sm:$0xf]
    %v358 = vld [vmem:[#allocation8 + $0x24] sm:$0xf]
    %v359 = vld [vmem:[#allocation8 + $0x28] sm:$0xf]
    %v360 = vld [vmem:[#allocation8 + $0x2c] sm:$0xf]
    %v361 = vld [vmem:[#allocation8 + $0x30] sm:$0xf]
    %v362 = vld [vmem:[#allocation8 + $0x34] sm:$0xf]
    %v363 = vld [vmem:[#allocation8 + $0x38] sm:$0xf]
    %v364 = vld [vmem:[#allocation8 + $0x3c] sm:$0xf]
    %v365 = vld [vmem:[%s6] sm:$0x1]
    %v367 = vlaneseq
    %v368 = vshrl.u32 %v367, 7
    %v369 = vsub.s32 0, %v368
    %v370 = vrot.slane %v365, %v369
    %v388 = vunpack.c.l.b16 %v349
    %v389 = vunpack.c.l.b16 %v350
    %v390 = vunpack.c.l.b16 %v351
    %v391 = vunpack.c.l.b16 %v352
    %v392 = vunpack.c.l.b16 %v353
    %v393 = vunpack.c.l.b16 %v354
    %v394 = vunpack.c.l.b16 %v355
    %v395 = vunpack.c.l.b16 %v356
    %v396 = vunpack.c.l.b16 %v357
    %v397 = vunpack.c.l.b16 %v358
    %v398 = vunpack.c.l.b16 %v359
    %v399 = vunpack.c.l.b16 %v360
    %v400 = vunpack.c.l.b16 %v361
    %v401 = vunpack.c.l.b16 %v362
    %v402 = vunpack.c.l.b16 %v363
    %v403 = vunpack.c.l.b16 %v364
    %v404 = vpack.c.b16 %v389, %v388
    %v405 = vpack.c.b16 %v391, %v390
    %v406 = vpack.c.b16 %v393, %v392
    %v407 = vpack.c.b16 %v395, %v394
    %v408 = vpack.c.b16 %v397, %v396
    %v409 = vpack.c.b16 %v399, %v398
    %v410 = vpack.c.b16 %v401, %v400
    %v411 = vpack.c.b16 %v403, %v402
    %420 = vmatprep.subr.bf16.mxu0 0
    %421 = vmatpush1.bf16.msra.mxu0 %v411
    %422 = vmatprep.subr.bf16.mxu0 0
    %423 = vmatpush1.bf16.msra.mxu0 %v410
    %424 = vmatprep.subr.bf16.mxu0 0
    %425 = vmatpush1.bf16.msra.mxu0 %v409
    %426 = vmatprep.subr.bf16.mxu0 0
    %427 = vmatpush1.bf16.msra.mxu0 %v408
    %428 = vmatprep.subr.bf16.mxu0 0
    %429 = vmatpush1.bf16.msra.mxu0 %v407
    %430 = vmatprep.subr.bf16.mxu0 0
    %431 = vmatpush1.bf16.msra.mxu0 %v406
    %432 = vmatprep.subr.bf16.mxu0 0
    %433 = vmatpush1.bf16.msra.mxu0 %v405
    %434 = vmatprep.subr.bf16.mxu0 0
    %435 = vmatpush1.bf16.msra.mxu0 %v404
    %436 = vmatprep.subr.bf16.mxu0 0
    %437 = vmatpush2.bf16.msra.mxu0 0
    %438 = vmatprep.subr.bf16.mxu0 0
    %439 = vmatpush2.bf16.msra.mxu0 0
    %440 = vmatprep.subr.bf16.mxu0 0
    %441 = vmatpush2.bf16.msra.mxu0 0
    %442 = vmatprep.subr.bf16.mxu0 0
    %443 = vmatpush2.bf16.msra.mxu0 0
    %444 = vmatprep.subr.bf16.mxu0 0
    %445 = vmatpush2.bf16.msra.mxu0 0
    %446 = vmatprep.subr.bf16.mxu0 0
    %447 = vmatpush2.bf16.msra.mxu0 0
    %448 = vmatprep.subr.bf16.mxu0 0
    %449 = vmatpush2.bf16.msra.mxu0 0
    %450 = vmatprep.subr.bf16.mxu0 0
    %451 = vmatpush2.bf16.msra.mxu0 0
    %452 = vmatprep.mubr.bf16.mxu0 0
    %453 = vmatmul.mubr.bf16.gmra.mxu0 %v348
    %v454 = vpop.f32.mrf.mxu0
    %v455 = vadd.f32 %v370, %v454
    %v456 = vpop.f32.mrf.mxu0
    %v457 = vpop.f32.mrf.mxu0
    %v458 = vpop.f32.mrf.mxu0
    %459 = vdwg.mxu0
    %v462 = vunpack.c.l.s4 1966171168
    %v463 = vunpack.c.0.s8 %v462
    %v464 = vlaneseq
    %v465 = vshrl.u32 %v464, 7
    %v466 = vsub.s32 %v463, %v465
    %v467 = vrot.slane %v455, %v466
    %v468 = vcombine.high %v467, %v467
    %v470 = vunpack.c.l.s4 1966171168
    %v471 = vunpack.c.0.s8 %v470
    %v472 = vlaneseq
    %v473 = vshrl.u32 %v472, 7
    %v474 = vsub.s32 %v471, %v473
    %v475 = vrot.slane %v467, %v474
    %v477 = vunpack.c.l.s4 1966171168
    %v478 = vunpack.c.0.s8 %v477
    %v479 = vlaneseq
    %v480 = vshrl.u32 %v479, 7
    %v481 = vsub.s32 %v478, %v480
    %v482 = vrot.slane %v468, %v481
    %v483 = vlaneseq
    %v484 = vshrl.u32 %v483, 7
    %v485 = vsub.s32 0, %v484
    %v486 = vrot.slane %v475, %v485
    %v487 = vlaneseq
    %v488 = vshrl.u32 %v487, 7
    %v489 = vsub.s32 0, %v488
    %v490 = vrot.slane %v482, %v489
    %v493 = vadd.f32 %v334, %v486
    %v494 = vadd.f32 %v337, %v486
    %v495 = vadd.f32 %v342, %v490
    %v496 = vadd.f32 %v345, %v490
    %v497 = vmax.f32 %v493, 0.0
    %v498 = vmax.f32 %v494, 0.0
    %v499 = vmax.f32 %v495, 0.0
    %v500 = vmax.f32 %v496, 0.0
    %v501 = vld [vmem:[%s7] sm:$0x1]
    %v503 = vlaneseq
    %v504 = vshrl.u32 %v503, 7
    %v505 = vsub.s32 0, %v504
    %v506 = vrot.slane %v501, %v505
    %v508 = vmul.f32 %v497, %v506
    %v509 = vmul.f32 %v498, %v506
    %v510 = vmul.f32 %v499, %v506
    %v511 = vmul.f32 %v500, %v506
    %512 = vadd.xlane.f32.xlu0 %v508
    %v513 = vpop.xlane.xlu0 %512
    %514 = vadd.xlane.f32.xlu0 %v509
    %v515 = vpop.xlane.xlu0 %514
    %516 = vadd.xlane.f32.xlu0 %v510
    %v517 = vpop.xlane.xlu0 %516
    %518 = vadd.xlane.f32.xlu0 %v511
    %v519 = vpop.xlane.xlu0 %518
    %v524 = vlaneseq
    %v525 = vand.u32 %v524, 127
    %v526 = vlaneseq
    %v527 = vshrl.u32 %v526, 7
    %v528 = vsub.s32 %v525, %v527
    %v529 = vrot.slane %v513, %v528
    %v530 = vadd.s32 %v525, 4294967288
    %v531 = vlaneseq
    %v532 = vshrl.u32 %v531, 7
    %v533 = vsub.s32 %v530, %v532
    %v534 = vrot.slane %v515, %v533
    %vm535 = vcmask 130112
    %v536 = vsel %vm535, %v534, %v529
    %v537 = vlaneseq
    %v538 = vshrl.u32 %v537, 7
    %v539 = vsub.s32 %v525, %v538
    %v540 = vrot.slane %v517, %v539
    %v541 = vlaneseq
    %v542 = vshrl.u32 %v541, 7
    %v543 = vsub.s32 %v530, %v542
    %v544 = vrot.slane %v519, %v543
    %v545 = vsel %vm535, %v544, %v540
    %v546 = vsel %vm145, %v545, %v536
    %vm548 = vcmask 123904
    %v549 = vsel %vm548, %v546, -inf
    %550 = vmax.xlane.f32.xlu0 %v549
    %v551 = vpop.xlane.xlu0 %550
    %v553 = vlaneseq
    %v554 = vshrl.u32 %v553, 7
    %v555 = vsub.s32 0, %v554
    %v556 = vrot.slane %v551, %v555
    %v557 = vlaneseq
    %v558 = vshrl.u32 %v557, 7
    %v559 = vsub.s32 1, %v558
    %v560 = vrot.slane %v551, %v559
    %v563 = vsub.f32 %v513, %v556
    %v564 = vsub.f32 %v515, %v556
    %v565 = vsub.f32 %v517, %v560
    %v566 = vsub.f32 %v519, %v560
    %v567 = vmul.f32 %v563, 1.442695
    %v568 = vpow.pop %v567
    %v569 = vmul.f32 %v564, 1.442695
    %v570 = vpow.pop %v569
    %v571 = vmul.f32 %v565, 1.442695
    %v572 = vpow.pop %v571
    %v573 = vmul.f32 %v566, 1.442695
    %v574 = vpow.pop %v573
    %579 = vset.pattern.permute.xlu0 0
    %580 = vperm.xlu0 %579, %v568
    %v581 = vpop.permute.xlu0 %580
    %582 = vset.pattern.permute.xlu0 0
    %583 = vperm.xlu0 %582, %v570
    %v584 = vpop.permute.xlu0 %583
    %585 = vset.pattern.permute.xlu0 0
    %586 = vperm.xlu0 %585, %v572
    %v587 = vpop.permute.xlu0 %586
    %588 = vset.pattern.permute.xlu0 0
    %589 = vperm.xlu0 %588, %v574
    %v590 = vpop.permute.xlu0 %589
    %v591 = vlaneseq
    %v592 = vshrl.u32 %v591, 7
    %v593 = vsub.s32 %v525, %v592
    %v594 = vrot.slane %v581, %v593
    %v595 = vlaneseq
    %v596 = vshrl.u32 %v595, 7
    %v597 = vsub.s32 %v530, %v596
    %v598 = vrot.slane %v584, %v597
    %v599 = vsel %vm535, %v598, %v594
    %v600 = vlaneseq
    %v601 = vshrl.u32 %v600, 7
    %v602 = vsub.s32 %v525, %v601
    %v603 = vrot.slane %v587, %v602
    %v604 = vlaneseq
    %v605 = vshrl.u32 %v604, 7
    %v606 = vsub.s32 %v530, %v605
    %v607 = vrot.slane %v590, %v606
    %v608 = vsel %vm535, %v607, %v603
    %v609 = vsel %vm145, %v608, %v599
    %v611 = vsel %vm548, %v609, 0.0
    %612 = vadd.xlane.f32.xlu0 %v611
    %v613 = vpop.xlane.xlu0 %612
    %v614 = vrcp.pop %v613
    %v616 = vlaneseq
    %v617 = vshrl.u32 %v616, 7
    %v618 = vsub.s32 0, %v617
    %v619 = vrot.slane %v614, %v618
    %v620 = vlaneseq
    %v621 = vshrl.u32 %v620, 7
    %v622 = vsub.s32 1, %v621
    %v623 = vrot.slane %v614, %v622
    %v626 = vmul.f32 %v568, %v619
    %v627 = vmul.f32 %v570, %v619
    %v628 = vmul.f32 %v572, %v623
    %v629 = vmul.f32 %v574, %v623
    %634 = vset.pattern.permute.xlu0 0
    %635 = vperm.xlu0 %634, %v626
    %v636 = vpop.permute.xlu0 %635
    %637 = vset.pattern.permute.xlu0 0
    %638 = vperm.xlu0 %637, %v627
    %v639 = vpop.permute.xlu0 %638
    %640 = vset.pattern.permute.xlu0 0
    %641 = vperm.xlu0 %640, %v628
    %v642 = vpop.permute.xlu0 %641
    %643 = vset.pattern.permute.xlu0 0
    %644 = vperm.xlu0 %643, %v629
    %v645 = vpop.permute.xlu0 %644
    %v646 = vlaneseq
    %v647 = vshrl.u32 %v646, 7
    %v648 = vsub.s32 %v525, %v647
    %v649 = vrot.slane %v636, %v648
    %v650 = vlaneseq
    %v651 = vshrl.u32 %v650, 7
    %v652 = vsub.s32 %v530, %v651
    %v653 = vrot.slane %v639, %v652
    %v654 = vsel %vm535, %v653, %v649
    %v655 = vlaneseq
    %v656 = vshrl.u32 %v655, 7
    %v657 = vsub.s32 %v525, %v656
    %v658 = vrot.slane %v642, %v657
    %v659 = vlaneseq
    %v660 = vshrl.u32 %v659, 7
    %v661 = vsub.s32 %v530, %v660
    %v662 = vrot.slane %v645, %v661
    %v663 = vsel %vm535, %v662, %v658
    %v664 = vsel %vm145, %v663, %v654
    %666 = vst.msk [vmem:[#allocation13] sm:$0x3] %vm548, %v664
    %v671 = vmul.f32 %v94, %v636
    %v672 = vmul.f32 %v95, %v639
    %v673 = vmul.f32 %v96, %v642
    %v674 = vmul.f32 %v97, %v645
    %v675 = vsel %vm98, %v671, 0.0
    %v676 = vsel %vm98, %v672, 0.0
    %v677 = vadd.f32 %v675, %v676
    %v678 = vrot.slane %v677, 4
    %v679 = vadd.f32 %v677, %v678
    %v680 = vrot.slane %v679, 2
    %v681 = vadd.f32 %v679, %v680
    %v682 = vrot.slane %v681, 1
    %v683 = vadd.f32 %v681, %v682
    %v684 = vsel %vm98, %v673, 0.0
    %v685 = vsel %vm98, %v674, 0.0
    %v686 = vadd.f32 %v684, %v685
    %v687 = vrot.slane %v686, 4
    %v688 = vadd.f32 %v686, %v687
    %v689 = vrot.slane %v688, 2
    %v690 = vadd.f32 %v688, %v689
    %v691 = vrot.slane %v690, 1
    %v692 = vadd.f32 %v690, %v691
    %v695 = vsel %vm145, %v692, %v683
    %vm697 = vcmask 517120
    %698 = vst.msk [vmem:[#allocation11] sm:$0x3] %vm697, %v695
    // Predicated region
    $region50: #{tpu_custom_call.1} parent=1 // pred_check
      _
    $region51: #{tpu_custom_call.1} parent=1 // pred_check_branch
      %700 = sbr.rel (0) target = $region53
    $region52: #{tpu_custom_call.1} parent=1 // pred_region
      %s702 = ssub.s32 64, 64
      %703 = vsyncadd [#allocation4], %s702
      %s705 = sshll.u32 [#allocation10], 4
      %s706 = int_to_ptr.vmem [resolvable:$true] %s705
      %708 = dma.vmem_to_hbm [thread:$0]  %s706, 64, %s8, [#allocation4]
    $region53: #{tpu_custom_call.1} parent=1 // pred_fallthru
      _
    // Predicated region
    $region54: #{tpu_custom_call.1} parent=1 // pred_check
      _
    $region55: #{tpu_custom_call.1} parent=1 // pred_check_branch
      %710 = sbr.rel (0) target = $region57
    $region56: #{tpu_custom_call.1} parent=1 // pred_region
      %s712 = ssub.s32 32, 32
      %713 = vsyncadd [#allocation12], %s712
      %s715 = sshll.u32 [#allocation11], 4
      %s716 = int_to_ptr.vmem [resolvable:$true] %s715
      %718 = dma.vmem_to_hbm [thread:$0]  %s716, 32, %s9, [#allocation12]
    $region57: #{tpu_custom_call.1} parent=1 // pred_fallthru
      _
    // Predicated region
    $region58: #{tpu_custom_call.1} parent=1 // pred_check
      _
    $region59: #{tpu_custom_call.1} parent=1 // pred_check_branch
      %720 = sbr.rel (0) target = $region61
    $region60: #{tpu_custom_call.1} parent=1 // pred_region
      %s722 = ssub.s32 32, 32
      %723 = vsyncadd [#allocation12], %s722
      %s725 = sshll.u32 [#allocation13], 4
      %s726 = int_to_ptr.vmem [resolvable:$true] %s725
      %728 = dma.vmem_to_hbm [thread:$0]  %s726, 32, %s10, [#allocation12]
    $region61: #{tpu_custom_call.1} parent=1 // pred_fallthru
      _
    // Predicated region
    $region62: #{tpu_custom_call.1} parent=1 // pred_check
      _
    $region63: #{tpu_custom_call.1} parent=1 // pred_check_branch
      %730 = sbr.rel (0) target = $region65
    $region64: #{tpu_custom_call.1} parent=1 // pred_region
      %731 = dma.done [#allocation4], 64
    $region65: #{tpu_custom_call.1} parent=1 // pred_fallthru
      _
    // Predicated region
    $region66: #{tpu_custom_call.1} parent=1 // pred_check
      _
    $region67: #{tpu_custom_call.1} parent=1 // pred_check_branch
      %733 = sbr.rel (0) target = $region69
    $region68: #{tpu_custom_call.1} parent=1 // pred_region
      %734 = dma.done [#allocation12], 32
    $region69: #{tpu_custom_call.1} parent=1 // pred_fallthru
      _
    // Predicated region
    $region70: #{tpu_custom_call.1} parent=1 // pred_check
      _
    $region71: #{tpu_custom_call.1} parent=1 // pred_check_branch
      %736 = sbr.rel (0) target = $region73
    $region72: #{tpu_custom_call.1} parent=1 // pred_region
      %737 = dma.done [#allocation12], 32
    $region73: #{tpu_custom_call.1} parent=1 // pred_fallthru
      _
    %738 = vsyncpa [#allocation3], 1
    %739 = vsyncpa [#allocation6], 1
    %740 = vsyncpa [#allocation9], 1
    %741 = vsyncpa [#allocation4], 1
    %742 = vsyncpa [#allocation12], 1

// kernel: tpu_custom_call.1
$region0: #{tpu_custom_call.1}
  #allocation0 [shape = 'u32[]', space=smem, size = 0x4, offset = 0x4, fixed_abs, tag = 'smem constant byte address 0x4 - core index']
  #allocation1 [shape = 'u32[144,128]{1,0:T(1,128)}', space=vmem, size = 0x12000, scoped, tag = 'internal scratch']
  %s0 = inlined_call_operand.hbm [shape: bf16[2,16,64], index: 0, kind: input, shape index: {}]
  %s1 = inlined_call_operand.hbm [shape: bf16[64,256], index: 1, kind: input, shape index: {}]
  %s2 = inlined_call_operand.vmem [shape: f32[1,256], index: 2, kind: input, shape index: {}]
  %s3 = inlined_call_operand.hbm [shape: bf16[64,128], index: 3, kind: input, shape index: {}]
  %s4 = inlined_call_operand.vmem [shape: f32[1,128], index: 4, kind: input, shape index: {}]
  %s5 = inlined_call_operand.hbm [shape: bf16[128,128], index: 5, kind: input, shape index: {}]
  %s6 = inlined_call_operand.vmem [shape: f32[1,128], index: 6, kind: input, shape index: {}]
  %s7 = inlined_call_operand.vmem [shape: f32[1,128], index: 7, kind: input, shape index: {}]
  %s8 = inlined_call_operand.hbm [shape: f32[2,256], index: 8, kind: output, shape index: {0}]
  %s9 = inlined_call_operand.hbm [shape: f32[2,64], index: 9, kind: output, shape index: {1}]
  %s10 = inlined_call_operand.hbm [shape: f32[2,16], index: 10, kind: output, shape index: {2}]
  %11 = xla_tuple %s8, %s9, %s10
  %s12 = sld [smem:[#allocation0]]
  $region74: #{tpu_custom_call.1} parent=0
    _
  %s14 = ssub.s32 1, %s12
  %s15 = scalar_select 0, %s14, %s12
  $region1: #{tpu_custom_call.1} parent=0
    #allocation2 [shape = 'u8[8192]{0}', space=vmem, size = 0x2000, scoped, tag = 'input window, operand 0, single buffered']
    #allocation3 [shape = 's32[1]{0}', space=sflag, size = 0x4, scoped, tag = 'scoped memory for tpu_custom_call.1']
    #allocation4 [shape = 's32[1]{0}', space=sflag, size = 0x4, scoped, tag = 'scoped memory for tpu_custom_call.1']
    #allocation5 [shape = 'u8[32768]{0}', space=vmem, size = 0x8000, scoped, tag = 'input window, operand 1, single buffered']
    #allocation6 [shape = 's32[1]{0}', space=sflag, size = 0x4, scoped, tag = 'scoped memory for tpu_custom_call.1']
    #allocation7 [shape = 'u8[16384]{0}', space=vmem, size = 0x4000, scoped, tag = 'input window, operand 3, single buffered']
    #allocation8 [shape = 'u8[32768]{0}', space=vmem, size = 0x8000, scoped, tag = 'input window, operand 5, single buffered']
    #allocation9 [shape = 's32[1]{0}', space=sflag, size = 0x4, scoped, tag = 'scoped memory for tpu_custom_call.1']
    #allocation10 [shape = 'u8[2048]{0}', space=vmem, size = 0x800, scoped, tag = 'output window, operand 0, single buffered']
    #allocation11 [shape = 'u8[1024]{0}', space=vmem, size = 0x400, scoped, tag = 'output window, operand 1, single buffered']
    #allocation12 [shape = 's32[1]{0}', space=sflag, size = 0x4, scoped, tag = 'scoped memory for tpu_custom_call.1']
    #allocation13 [shape = 'u8[1024]{0}', space=vmem, size = 0x400, scoped, tag = 'output window, operand 2, single buffered']
    %16 = vsyncpa [#allocation3], 0
    %17 = vsyncpa [#allocation6], 0
    %18 = vsyncpa [#allocation9], 0
    %19 = vsyncpa [#allocation4], 0
    %20 = vsyncpa [#allocation12], 0
    // Predicated region
    $region2: #{tpu_custom_call.1} parent=1 // pred_check
      _
    $region3: #{tpu_custom_call.1} parent=1 // pred_check_branch
      %22 = sbr.rel (0) target = $region5
    $region4: #{tpu_custom_call.1} parent=1 // pred_region
      %s24 = ssub.s32 256, 256
      %25 = vsyncadd [#allocation3], %s24
      %s26 = sshll.u32 [#allocation2], 4
      %s27 = int_to_ptr.vmem [resolvable:$true] %s26
      %32 = dma.hbm_to_vmem [thread:$0]  %s0, 256, %s27, [#allocation3], 64, 64, 4
    $region5: #{tpu_custom_call.1} parent=1 // pred_fallthru
      _
    // Predicated region
    $region6: #{tpu_custom_call.1} parent=1 // pred_check
      _
    $region7: #{tpu_custom_call.1} parent=1 // pred_check_branch
      %34 = sbr.rel (0) target = $region9
    $region8: #{tpu_custom_call.1} parent=1 // pred_region
      %s36 = ssub.s32 1024, 1024
      %37 = vsyncadd [#allocation6], %s36
      %s38 = sshll.u32 [#allocation5], 4
      %s39 = int_to_ptr.vmem [resolvable:$true] %s38
      %44 = dma.hbm_to_vmem [thread:$0]  %s1, 1024, %s39, [#allocation6], 128, 128, 8
    $region9: #{tpu_custom_call.1} parent=1 // pred_fallthru
      _
    // Predicated region
    $region10: #{tpu_custom_call.1} parent=1 // pred_check
      _
    $region11: #{tpu_custom_call.1} parent=1 // pred_check_branch
      %46 = sbr.rel (0) target = $region13
    $region12: #{tpu_custom_call.1} parent=1 // pred_region
      _
    $region13: #{tpu_custom_call.1} parent=1 // pred_fallthru
      _
    // Predicated region
    $region14: #{tpu_custom_call.1} parent=1 // pred_check
      _
    $region15: #{tpu_custom_call.1} parent=1 // pred_check_branch
      %48 = sbr.rel (0) target = $region17
    $region16: #{tpu_custom_call.1} parent=1 // pred_region
      %s50 = ssub.s32 512, 512
      %51 = vsyncadd [#allocation6], %s50
      %s52 = sshll.u32 [#allocation7], 4
      %s53 = int_to_ptr.vmem [resolvable:$true] %s52
      %58 = dma.hbm_to_vmem [thread:$0]  %s3, 512, %s53, [#allocation6], 64, 64, 4
    $region17: #{tpu_custom_call.1} parent=1 // pred_fallthru
      _
    // Predicated region
    $region18: #{tpu_custom_call.1} parent=1 // pred_check
      _
    $region19: #{tpu_custom_call.1} parent=1 // pred_check_branch
      %60 = sbr.rel (0) target = $region21
    $region20: #{tpu_custom_call.1} parent=1 // pred_region
      _
    $region21: #{tpu_custom_call.1} parent=1 // pred_fallthru
      _
    // Predicated region
    $region22: #{tpu_custom_call.1} parent=1 // pred_check
      _
    $region23: #{tpu_custom_call.1} parent=1 // pred_check_branch
      %62 = sbr.rel (0) target = $region25
    $region24: #{tpu_custom_call.1} parent=1 // pred_region
      %s64 = ssub.s32 1024, 1024
      %65 = vsyncadd [#allocation9], %s64
      %s66 = sshll.u32 [#allocation8], 4
      %s67 = int_to_ptr.vmem [resolvable:$true] %s66
      %72 = dma.hbm_to_vmem [thread:$0]  %s5, 1024, %s67, [#allocation9], 64, 64, 4
    $region25: #{tpu_custom_call.1} parent=1 // pred_fallthru
      _
    // Predicated region
    $region26: #{tpu_custom_call.1} parent=1 // pred_check
      _
    $region27: #{tpu_custom_call.1} parent=1 // pred_check_branch
      %74 = sbr.rel (0) target = $region29
    $region28: #{tpu_custom_call.1} parent=1 // pred_region
      _
    $region29: #{tpu_custom_call.1} parent=1 // pred_fallthru
      _
    // Predicated region
    $region30: #{tpu_custom_call.1} parent=1 // pred_check
      _
    $region31: #{tpu_custom_call.1} parent=1 // pred_check_branch
      %76 = sbr.rel (0) target = $region33
    $region32: #{tpu_custom_call.1} parent=1 // pred_region
      _
    $region33: #{tpu_custom_call.1} parent=1 // pred_fallthru
      _
    // Predicated region
    $region34: #{tpu_custom_call.1} parent=1 // pred_check
      _
    $region35: #{tpu_custom_call.1} parent=1 // pred_check_branch
      %78 = sbr.rel (0) target = $region37
    $region36: #{tpu_custom_call.1} parent=1 // pred_region
      %79 = dma.done [#allocation3], 256
    $region37: #{tpu_custom_call.1} parent=1 // pred_fallthru
      _
    // Predicated region
    $region38: #{tpu_custom_call.1} parent=1 // pred_check
      _
    $region39: #{tpu_custom_call.1} parent=1 // pred_check_branch
      %81 = sbr.rel (0) target = $region41
    $region40: #{tpu_custom_call.1} parent=1 // pred_region
      %82 = dma.done [#allocation6], 1024
    $region41: #{tpu_custom_call.1} parent=1 // pred_fallthru
      _
    // Predicated region
    $region42: #{tpu_custom_call.1} parent=1 // pred_check
      _
    $region43: #{tpu_custom_call.1} parent=1 // pred_check_branch
      %84 = sbr.rel (0) target = $region45
    $region44: #{tpu_custom_call.1} parent=1 // pred_region
      %85 = dma.done [#allocation6], 512
    $region45: #{tpu_custom_call.1} parent=1 // pred_fallthru
      _
    // Predicated region
    $region46: #{tpu_custom_call.1} parent=1 // pred_check
      _
    $region47: #{tpu_custom_call.1} parent=1 // pred_check_branch
      %87 = sbr.rel (0) target = $region49
    $region48: #{tpu_custom_call.1} parent=1 // pred_region
      %88 = dma.done [#allocation9], 1024
    $region49: #{tpu_custom_call.1} parent=1 // pred_fallthru
      _
    %v90 = vld [vmem:[#allocation2] sm:$0xf]
    %v91 = vld [vmem:[#allocation2 + $0x4] sm:$0xf]
    %v92 = vld [vmem:[#allocation2 + $0x8] sm:$0xf]
    %v93 = vld [vmem:[#allocation2 + $0xc] sm:$0xf]
    %v94 = vunpack.c.l.bf16 %v90
    %v95 = vunpack.c.l.bf16 %v91
    %v96 = vunpack.c.l.bf16 %v92
    %v97 = vunpack.c.l.bf16 %v93
    %vm98 = vcmask 523264
    %v99 = vsel %vm98, %v94, 0.0
    %v100 = vsel %vm98, %v95, 0.0
    %v101 = vadd.f32 %v99, %v100
    %v102 = vrot.slane %v101, 4
    %v103 = vadd.f32 %v101, %v102
    %v104 = vrot.slane %v103, 2
    %v105 = vadd.f32 %v103, %v104
    %v106 = vrot.slane %v105, 1
    %v107 = vadd.f32 %v105, %v106
    %v108 = vsel %vm98, %v96, 0.0
    %v109 = vsel %vm98, %v97, 0.0
    %v110 = vadd.f32 %v108, %v109
    %v111 = vrot.slane %v110, 4
    %v112 = vadd.f32 %v110, %v111
    %v113 = vrot.slane %v112, 2
    %v114 = vadd.f32 %v112, %v113
    %v115 = vrot.slane %v114, 1
    %v116 = vadd.f32 %v114, %v115
    %v117 = vmul.f32 %v107, 0.0625
    %v118 = vmul.f32 %v116, 0.0625
    %v119 = vpack.c.bf16 %v117, %v117
    %v120 = vpack.c.bf16 %v118, %v118
    %v121 = vld [vmem:[#allocation5] sm:$0xff]
    %v122 = vld [vmem:[#allocation5 + $0x8] sm:$0xff]
    %v123 = vld [vmem:[#allocation5 + $0x10] sm:$0xff]
    %v124 = vld [vmem:[#allocation5 + $0x18] sm:$0xff]
    %v125 = vld [vmem:[#allocation5 + $0x20] sm:$0xff]
    %v126 = vld [vmem:[#allocation5 + $0x28] sm:$0xff]
    %v127 = vld [vmem:[#allocation5 + $0x30] sm:$0xff]
    %v128 = vld [vmem:[#allocation5 + $0x38] sm:$0xff]
    %v129 = vld [vmem:[%s2] sm:$0x3]
    %v131 = vlaneseq
    %v132 = vshrl.u32 %v131, 7
    %v133 = vsub.s32 0, %v132
    %v134 = vrot.slane %v129, %v133
    %v135 = vlaneseq
    %v136 = vshrl.u32 %v135, 7
    %v137 = vsub.s32 1, %v136
    %v138 = vrot.slane %v129, %v137
    %v143 = vunpack.c.l.b16 %v119
    %v144 = vunpack.c.l.b16 %v120
    %vm145 = vcmask 1041409
    %v146 = vsel %vm145, %v144, %v143
    %v147 = vpack.c.b16 %v146, %v146
    %v156 = vunpack.c.l.b16 %v121
    %v157 = vunpack.c.h.b16 %v121
    %v158 = vunpack.c.l.b16 %v122
    %v159 = vunpack.c.h.b16 %v122
    %v160 = vunpack.c.l.b16 %v123
    %v161 = vunpack.c.h.b16 %v123
    %v162 = vunpack.c.l.b16 %v124
    %v163 = vunpack.c.h.b16 %v124
    %v164 = vunpack.c.l.b16 %v125
    %v165 = vunpack.c.h.b16 %v125
    %v166 = vunpack.c.l.b16 %v126
    %v167 = vunpack.c.h.b16 %v126
    %v168 = vunpack.c.l.b16 %v127
    %v169 = vunpack.c.h.b16 %v127
    %v170 = vunpack.c.l.b16 %v128
    %v171 = vunpack.c.h.b16 %v128
    %v172 = vpack.c.b16 %v158, %v156
    %v173 = vpack.c.b16 %v159, %v157
    %v174 = vpack.c.b16 %v162, %v160
    %v175 = vpack.c.b16 %v163, %v161
    %v176 = vpack.c.b16 %v166, %v164
    %v177 = vpack.c.b16 %v167, %v165
    %v178 = vpack.c.b16 %v170, %v168
    %v179 = vpack.c.b16 %v171, %v169
    %v189 = vsel %vm98, %v147, 0
    %191 = vmatprep.subr.bf16.mxu0 0
    %192 = vmatpush1.bf16.msra.mxu0 0
    %193 = vmatprep.subr.bf16.mxu0 0
    %194 = vmatpush1.bf16.msra.mxu0 0
    %195 = vmatprep.subr.bf16.mxu0 0
    %196 = vmatpush1.bf16.msra.mxu0 0
    %197 = vmatprep.subr.bf16.mxu0 0
    %198 = vmatpush1.bf16.msra.mxu0 0
    %199 = vmatprep.subr.bf16.mxu0 %v179
    %200 = vmatpush1.bf16.msra.mxu0 %v178
    %201 = vmatprep.subr.bf16.mxu0 %v177
    %202 = vmatpush1.bf16.msra.mxu0 %v176
    %203 = vmatprep.subr.bf16.mxu0 %v175
    %204 = vmatpush1.bf16.msra.mxu0 %v174
    %205 = vmatprep.subr.bf16.mxu0 %v173
    %206 = vmatpush1.bf16.msra.mxu0 %v172
    %207 = vmatprep.subr.bf16.mxu0 0
    %208 = vmatpush2.bf16.msra.mxu0 0
    %209 = vmatprep.subr.bf16.mxu0 0
    %210 = vmatpush2.bf16.msra.mxu0 0
    %211 = vmatprep.subr.bf16.mxu0 0
    %212 = vmatpush2.bf16.msra.mxu0 0
    %213 = vmatprep.subr.bf16.mxu0 0
    %214 = vmatpush2.bf16.msra.mxu0 0
    %215 = vmatprep.subr.bf16.mxu0 0
    %216 = vmatpush2.bf16.msra.mxu0 0
    %217 = vmatprep.subr.bf16.mxu0 0
    %218 = vmatpush2.bf16.msra.mxu0 0
    %219 = vmatprep.subr.bf16.mxu0 0
    %220 = vmatpush2.bf16.msra.mxu0 0
    %221 = vmatprep.subr.bf16.mxu0 0
    %222 = vmatpush2.bf16.msra.mxu0 0
    %223 = vmatprep.mubr.bf16.mxu0 0
    %224 = vmatmul.mubr.bf16.gmra.mxu0 %v189
    %v225 = vpop.f32.mrf.mxu0
    %v226 = vadd.f32 %v134, %v225
    %v227 = vpop.f32.mrf.mxu0
    %v228 = vadd.f32 %v138, %v227
    %v229 = vpop.f32.mrf.mxu0
    %v230 = vpop.f32.mrf.mxu0
    %231 = vdwg.mxu0
    %v234 = vcombine.low %v226, %v228
    %v236 = vunpack.c.l.s4 1983009808
    %v237 = vunpack.c.0.s8 %v236
    %v238 = vlaneseq
    %v239 = vshrl.u32 %v238, 7
    %v240 = vsub.s32 %v237, %v239
    %v241 = vrot.slane %v234, %v240
    %243 = vst [vmem:[#allocation10] sm:$0xf] %v241
    %v244 = vld [vmem:[#allocation7] sm:$0xf]
    %v245 = vld [vmem:[#allocation7 + $0x4] sm:$0xf]
    %v246 = vld [vmem:[#allocation7 + $0x8] sm:$0xf]
    %v247 = vld [vmem:[#allocation7 + $0xc] sm:$0xf]
    %v248 = vld [vmem:[#allocation7 + $0x10] sm:$0xf]
    %v249 = vld [vmem:[#allocation7 + $0x14] sm:$0xf]
    %v250 = vld [vmem:[#allocation7 + $0x18] sm:$0xf]
    %v251 = vld [vmem:[#allocation7 + $0x1c] sm:$0xf]
    %v252 = vld [vmem:[%s4] sm:$0x1]
    %v254 = vlaneseq
    %v255 = vshrl.u32 %v254, 7
    %v256 = vsub.s32 0, %v255
    %v257 = vrot.slane %v252, %v256
    %v263 = vunpack.c.l.b16 %v90
    %v264 = vunpack.c.l.b16 %v91
    %v265 = vunpack.c.l.b16 %v92
    %v266 = vunpack.c.l.b16 %v93
    %v267 = vpack.c.b16 %v264, %v263
    %v268 = vpack.c.b16 %v266, %v265
    %v277 = vunpack.c.l.b16 %v244
    %v278 = vunpack.c.l.b16 %v245
    %v279 = vunpack.c.l.b16 %v246
    %v280 = vunpack.c.l.b16 %v247
    %v281 = vunpack.c.l.b16 %v248
    %v282 = vunpack.c.l.b16 %v249
    %v283 = vunpack.c.l.b16 %v250
    %v284 = vunpack.c.l.b16 %v251
    %v285 = vpack.c.b16 %v278, %v277
    %v286 = vpack.c.b16 %v280, %v279
    %v287 = vpack.c.b16 %v282, %v281
    %v288 = vpack.c.b16 %v284, %v283
    %v294 = vsel %vm98, %v267, 0
    %v297 = vsel %vm98, %v268, 0
    %299 = vmatprep.subr.bf16.mxu0 0
    %300 = vmatpush1.bf16.msra.mxu0 0
    %301 = vmatprep.subr.bf16.mxu0 0
    %302 = vmatpush1.bf16.msra.mxu0 0
    %303 = vmatprep.subr.bf16.mxu0 0
    %304 = vmatpush1.bf16.msra.mxu0 0
    %305 = vmatprep.subr.bf16.mxu0 0
    %306 = vmatpush1.bf16.msra.mxu0 0
    %307 = vmatprep.subr.bf16.mxu0 0
    %308 = vmatpush1.bf16.msra.mxu0 %v288
    %309 = vmatprep.subr.bf16.mxu0 0
    %310 = vmatpush1.bf16.msra.mxu0 %v287
    %311 = vmatprep.subr.bf16.mxu0 0
    %312 = vmatpush1.bf16.msra.mxu0 %v286
    %313 = vmatprep.subr.bf16.mxu0 0
    %314 = vmatpush1.bf16.msra.mxu0 %v285
    %315 = vmatprep.subr.bf16.mxu0 0
    %316 = vmatpush2.bf16.msra.mxu0 0
    %317 = vmatprep.subr.bf16.mxu0 0
    %318 = vmatpush2.bf16.msra.mxu0 0
    %319 = vmatprep.subr.bf16.mxu0 0
    %320 = vmatpush2.bf16.msra.mxu0 0
    %321 = vmatprep.subr.bf16.mxu0 0
    %322 = vmatpush2.bf16.msra.mxu0 0
    %323 = vmatprep.subr.bf16.mxu0 0
    %324 = vmatpush2.bf16.msra.mxu0 0
    %325 = vmatprep.subr.bf16.mxu0 0
    %326 = vmatpush2.bf16.msra.mxu0 0
    %327 = vmatprep.subr.bf16.mxu0 0
    %328 = vmatpush2.bf16.msra.mxu0 0
    %329 = vmatprep.subr.bf16.mxu0 0
    %330 = vmatpush2.bf16.msra.mxu0 0
    %331 = vmatprep.mubr.bf16.mxu0 0
    %332 = vmatmul.mubr.bf16.gmra.mxu0 %v294
    %v333 = vpop.f32.mrf.mxu0
    %v334 = vadd.f32 %v257, %v333
    %v335 = vpop.f32.mrf.mxu0
    %v336 = vpop.f32.mrf.mxu0
    %v337 = vadd.f32 %v257, %v336
    %v338 = vpop.f32.mrf.mxu0
    %339 = vmatprep.mubr.bf16.mxu0 0
    %340 = vmatmul.mubr.bf16.gmra.mxu0 %v297
    %v341 = vpop.f32.mrf.mxu0
    %v342 = vadd.f32 %v257, %v341
    %v343 = vpop.f32.mrf.mxu0
    %v344 = vpop.f32.mrf.mxu0
    %v345 = vadd.f32 %v257, %v344
    %v346 = vpop.f32.mrf.mxu0
    %347 = vdwg.mxu0
    %v348 = vpack.c.bf16 %v226, %v226
    %v349 = vld [vmem:[#allocation8] sm:$0xf]
    %v350 = vld [vmem:[#allocation8 + $0x4] sm:$0xf]
    %v351 = vld [vmem:[#allocation8 + $0x8] sm:$0xf]
    %v352 = vld [vmem:[#allocation8 + $0xc] sm:$0xf]
    %v353 = vld [vmem:[#allocation8 + $0x10] sm:$0xf]
    %v354 = vld [vmem:[#allocation8 + $0x14] sm:$0xf]
    %v355 = vld [vmem:[#allocation8 + $0x18] sm:$0xf]
    %v356 = vld [vmem:[#allocation8 + $0x1c] sm:$0xf]
    %v357 = vld [vmem:[#allocation8 + $0x20] sm:$0xf]
    %v358 = vld [vmem:[#allocation8 + $0x24] sm:$0xf]
    %v359 = vld [vmem:[#allocation8 + $0x28] sm:$0xf]
    %v360 = vld [vmem:[#allocation8 + $0x2c] sm:$0xf]
    %v361 = vld [vmem:[#allocation8 + $0x30] sm:$0xf]
    %v362 = vld [vmem:[#allocation8 + $0x34] sm:$0xf]
    %v363 = vld [vmem:[#allocation8 + $0x38] sm:$0xf]
    %v364 = vld [vmem:[#allocation8 + $0x3c] sm:$0xf]
    %v365 = vld [vmem:[%s6] sm:$0x1]
    %v367 = vlaneseq
    %v368 = vshrl.u32 %v367, 7
    %v369 = vsub.s32 0, %v368
    %v370 = vrot.slane %v365, %v369
    %v388 = vunpack.c.l.b16 %v349
    %v389 = vunpack.c.l.b16 %v350
    %v390 = vunpack.c.l.b16 %v351
    %v391 = vunpack.c.l.b16 %v352
    %v392 = vunpack.c.l.b16 %v353
    %v393 = vunpack.c.l.b16 %v354
    %v394 = vunpack.c.l.b16 %v355
    %v395 = vunpack.c.l.b16 %v356
    %v396 = vunpack.c.l.b16 %v357
    %v397 = vunpack.c.l.b16 %v358
    %v398 = vunpack.c.l.b16 %v359
    %v399 = vunpack.c.l.b16 %v360
    %v400 = vunpack.c.l.b16 %v361
    %v401 = vunpack.c.l.b16 %v362
    %v402 = vunpack.c.l.b16 %v363
    %v403 = vunpack.c.l.b16 %v364
    %v404 = vpack.c.b16 %v389, %v388
    %v405 = vpack.c.b16 %v391, %v390
    %v406 = vpack.c.b16 %v393, %v392
    %v407 = vpack.c.b16 %v395, %v394
    %v408 = vpack.c.b16 %v397, %v396
    %v409 = vpack.c.b16 %v399, %v398
    %v410 = vpack.c.b16 %v401, %v400
    %v411 = vpack.c.b16 %v403, %v402
    %420 = vmatprep.subr.bf16.mxu0 0
    %421 = vmatpush1.bf16.msra.mxu0 %v411
    %422 = vmatprep.subr.bf16.mxu0 0
    %423 = vmatpush1.bf16.msra.mxu0 %v410
    %424 = vmatprep.subr.bf16.mxu0 0
    %425 = vmatpush1.bf16.msra.mxu0 %v409
    %426 = vmatprep.subr.bf16.mxu0 0
    %427 = vmatpush1.bf16.msra.mxu0 %v408
    %428 = vmatprep.subr.bf16.mxu0 0
    %429 = vmatpush1.bf16.msra.mxu0 %v407
    %430 = vmatprep.subr.bf16.mxu0 0
    %431 = vmatpush1.bf16.msra.mxu0 %v406
    %432 = vmatprep.subr.bf16.mxu0 0
    %433 = vmatpush1.bf16.msra.mxu0 %v405
    %434 = vmatprep.subr.bf16.mxu0 0
    %435 = vmatpush1.bf16.msra.mxu0 %v404
    %436 = vmatprep.subr.bf16.mxu0 0
    %437 = vmatpush2.bf16.msra.mxu0 0
    %438 = vmatprep.subr.bf16.mxu0 0
    %439 = vmatpush2.bf16.msra.mxu0 0
    %440 = vmatprep.subr.bf16.mxu0 0
    %441 = vmatpush2.bf16.msra.mxu0 0
    %442 = vmatprep.subr.bf16.mxu0 0
    %443 = vmatpush2.bf16.msra.mxu0 0
    %444 = vmatprep.subr.bf16.mxu0 0
    %445 = vmatpush2.bf16.msra.mxu0 0
    %446 = vmatprep.subr.bf16.mxu0 0
    %447 = vmatpush2.bf16.msra.mxu0 0
    %448 = vmatprep.subr.bf16.mxu0 0
    %449 = vmatpush2.bf16.msra.mxu0 0
    %450 = vmatprep.subr.bf16.mxu0 0
    %451 = vmatpush2.bf16.msra.mxu0 0
    %452 = vmatprep.mubr.bf16.mxu0 0
    %453 = vmatmul.mubr.bf16.gmra.mxu0 %v348
    %v454 = vpop.f32.mrf.mxu0
    %v455 = vadd.f32 %v370, %v454
    %v456 = vpop.f32.mrf.mxu0
    %v457 = vpop.f32.mrf.mxu0
    %v458 = vpop.f32.mrf.mxu0
    %459 = vdwg.mxu0
    %v462 = vunpack.c.l.s4 1966171168
    %v463 = vunpack.c.0.s8 %v462
    %v464 = vlaneseq
    %v465 = vshrl.u32 %v464, 7
    %v466 = vsub.s32 %v463, %v465
    %v467 = vrot.slane %v455, %v466
    %v468 = vcombine.high %v467, %v467
    %v470 = vunpack.c.l.s4 1966171168
    %v471 = vunpack.c.0.s8 %v470
    %v472 = vlaneseq
    %v473 = vshrl.u32 %v472, 7
    %v474 = vsub.s32 %v471, %v473
    %v475 = vrot.slane %v467, %v474
    %v477 = vunpack.c.l.s4 1966171168
    %v478 = vunpack.c.0.s8 %v477
    %v479 = vlaneseq
    %v480 = vshrl.u32 %v479, 7
    %v481 = vsub.s32 %v478, %v480
    %v482 = vrot.slane %v468, %v481
    %v483 = vlaneseq
    %v484 = vshrl.u32 %v483, 7
    %v485 = vsub.s32 0, %v484
    %v486 = vrot.slane %v475, %v485
    %v487 = vlaneseq
    %v488 = vshrl.u32 %v487, 7
    %v489 = vsub.s32 0, %v488
    %v490 = vrot.slane %v482, %v489
    %v493 = vadd.f32 %v334, %v486
    %v494 = vadd.f32 %v337, %v486
    %v495 = vadd.f32 %v342, %v490
    %v496 = vadd.f32 %v345, %v490
    %v497 = vmax.f32 %v493, 0.0
    %v498 = vmax.f32 %v494, 0.0
    %v499 = vmax.f32 %v495, 0.0
    %v500 = vmax.f32 %v496, 0.0
    %v501 = vld [vmem:[%s7] sm:$0x1]
    %v503 = vlaneseq
    %v504 = vshrl.u32 %v503, 7
    %v505 = vsub.s32 0, %v504
    %v506 = vrot.slane %v501, %v505
    %v508 = vmul.f32 %v497, %v506
    %v509 = vmul.f32 %v498, %v506
    %v510 = vmul.f32 %v499, %v506
    %v511 = vmul.f32 %v500, %v506
    %512 = vadd.xlane.f32.xlu0 %v508
    %v513 = vpop.xlane.xlu0 %512
    %514 = vadd.xlane.f32.xlu0 %v509
    %v515 = vpop.xlane.xlu0 %514
    %516 = vadd.xlane.f32.xlu0 %v510
    %v517 = vpop.xlane.xlu0 %516
    %518 = vadd.xlane.f32.xlu0 %v511
    %v519 = vpop.xlane.xlu0 %518
    %v524 = vlaneseq
    %v525 = vand.u32 %v524, 127
    %v526 = vlaneseq
    %v527 = vshrl.u32 %v526, 7
    %v528 = vsub.s32 %v525, %v527
    %v529 = vrot.slane %v513, %v528
    %v530 = vadd.s32 %v525, 4294967288
    %v531 = vlaneseq
    %v532 = vshrl.u32 %v531, 7
    %v533 = vsub.s32 %v530, %v532
    %v534 = vrot.slane %v515, %v533
    %vm535 = vcmask 130112
    %v536 = vsel %vm535, %v534, %v529
    %v537 = vlaneseq
    %v538 = vshrl.u32 %v537, 7
    %v539 = vsub.s32 %v525, %v538
    %v540 = vrot.slane %v517, %v539
    %v541 = vlaneseq
    %v542 = vshrl.u32 %v541, 7
    %v543 = vsub.s32 %v530, %v542
    %v544 = vrot.slane %v519, %v543
    %v545 = vsel %vm535, %v544, %v540
    %v546 = vsel %vm145, %v545, %v536
    %vm548 = vcmask 123904
    %v549 = vsel %vm548, %v546, -inf
    %550 = vmax.xlane.f32.xlu0 %v549
    %v551 = vpop.xlane.xlu0 %550
    %v553 = vlaneseq
    %v554 = vshrl.u32 %v553, 7
    %v555 = vsub.s32 0, %v554
    %v556 = vrot.slane %v551, %v555
    %v557 = vlaneseq
    %v558 = vshrl.u32 %v557, 7
    %v559 = vsub.s32 1, %v558
    %v560 = vrot.slane %v551, %v559
    %v563 = vsub.f32 %v513, %v556
    %v564 = vsub.f32 %v515, %v556
    %v565 = vsub.f32 %v517, %v560
    %v566 = vsub.f32 %v519, %v560
    %v567 = vmul.f32 %v563, 1.442695
    %v568 = vpow.pop %v567
    %v569 = vmul.f32 %v564, 1.442695
    %v570 = vpow.pop %v569
    %v571 = vmul.f32 %v565, 1.442695
    %v572 = vpow.pop %v571
    %v573 = vmul.f32 %v566, 1.442695
    %v574 = vpow.pop %v573
    %579 = vset.pattern.permute.xlu0 0
    %580 = vperm.xlu0 %579, %v568
    %v581 = vpop.permute.xlu0 %580
    %582 = vset.pattern.permute.xlu0 0
    %583 = vperm.xlu0 %582, %v570
    %v584 = vpop.permute.xlu0 %583
    %585 = vset.pattern.permute.xlu0 0
    %586 = vperm.xlu0 %585, %v572
    %v587 = vpop.permute.xlu0 %586
    %588 = vset.pattern.permute.xlu0 0
    %589 = vperm.xlu0 %588, %v574
    %v590 = vpop.permute.xlu0 %589
    %v591 = vlaneseq
    %v592 = vshrl.u32 %v591, 7
    %v593 = vsub.s32 %v525, %v592
    %v594 = vrot.slane %v581, %v593
    %v595 = vlaneseq
    %v596 = vshrl.u32 %v595, 7
    %v597 = vsub.s32 %v530, %v596
    %v598 = vrot.slane %v584, %v597
    %v599 = vsel %vm535, %v598, %v594
    %v600 = vlaneseq
    %v601 = vshrl.u32 %v600, 7
    %v602 = vsub.s32 %v525, %v601
    %v603 = vrot.slane %v587, %v602
    %v604 = vlaneseq
    %v605 = vshrl.u32 %v604, 7
    %v606 = vsub.s32 %v530, %v605
    %v607 = vrot.slane %v590, %v606
    %v608 = vsel %vm535, %v607, %v603
    %v609 = vsel %vm145, %v608, %v599
    %v611 = vsel %vm548, %v609, 0.0
    %612 = vadd.xlane.f32.xlu0 %v611
    %v613 = vpop.xlane.xlu0 %612
    %v614 = vrcp.pop %v613
    %v616 = vlaneseq
    %v617 = vshrl.u32 %v616, 7
    %v618 = vsub.s32 0, %v617
    %v619 = vrot.slane %v614, %v618
    %v620 = vlaneseq
    %v621 = vshrl.u32 %v620, 7
    %v622 = vsub.s32 1, %v621
    %v623 = vrot.slane %v614, %v622
    %v626 = vmul.f32 %v568, %v619
    %v627 = vmul.f32 %v570, %v619
    %v628 = vmul.f32 %v572, %v623
    %v629 = vmul.f32 %v574, %v623
    %634 = vset.pattern.permute.xlu0 0
    %635 = vperm.xlu0 %634, %v626
    %v636 = vpop.permute.xlu0 %635
    %637 = vset.pattern.permute.xlu0 0
    %638 = vperm.xlu0 %637, %v627
    %v639 = vpop.permute.xlu0 %638
    %640 = vset.pattern.permute.xlu0 0
    %641 = vperm.xlu0 %640, %v628
    %v642 = vpop.permute.xlu0 %641
    %643 = vset.pattern.permute.xlu0 0
    %644 = vperm.xlu0 %643, %v629
    %v645 = vpop.permute.xlu0 %644
    %v646 = vlaneseq
    %v647 = vshrl.u32 %v646, 7
    %v648 = vsub.s32 %v525, %v647
    %v649 = vrot.slane %v636, %v648
    %v650 = vlaneseq
    %v651 = vshrl.u32 %v650, 7
    %v652 = vsub.s32 %v530, %v651
    %v653 = vrot.slane %v639, %v652
    %v654 = vsel %vm535, %v653, %v649
    %v655 = vlaneseq
    %v656 = vshrl.u32 %v655, 7
    %v657 = vsub.s32 %v525, %v656
    %v658 = vrot.slane %v642, %v657
    %v659 = vlaneseq
    %v660 = vshrl.u32 %v659, 7
    %v661 = vsub.s32 %v530, %v660
    %v662 = vrot.slane %v645, %v661
    %v663 = vsel %vm535, %v662, %v658
    %v664 = vsel %vm145, %v663, %v654
    %666 = vst.msk [vmem:[#allocation13] sm:$0x3] %vm548, %v664
    %v671 = vmul.f32 %v94, %v636
    %v672 = vmul.f32 %v95, %v639
    %v673 = vmul.f32 %v96, %v642
    %v674 = vmul.f32 %v97, %v645
    %v675 = vsel %vm98, %v671, 0.0
    %v676 = vsel %vm98, %v672, 0.0
    %v677 = vadd.f32 %v675, %v676
    %v678 = vrot.slane %v677, 4
    %v679 = vadd.f32 %v677, %v678
    %v680 = vrot.slane %v679, 2
    %v681 = vadd.f32 %v679, %v680
    %v682 = vrot.slane %v681, 1
    %v683 = vadd.f32 %v681, %v682
    %v684 = vsel %vm98, %v673, 0.0
    %v685 = vsel %vm98, %v674, 0.0
    %v686 = vadd.f32 %v684, %v685
    %v687 = vrot.slane %v686, 4
    %v688 = vadd.f32 %v686, %v687
    %v689 = vrot.slane %v688, 2
    %v690 = vadd.f32 %v688, %v689
    %v691 = vrot.slane %v690, 1
    %v692 = vadd.f32 %v690, %v691
    %v695 = vsel %vm145, %v692, %v683
    %vm697 = vcmask 517120
    %698 = vst.msk [vmem:[#allocation11] sm:$0x3] %vm697, %v695
    // Predicated region
    $region50: #{tpu_custom_call.1} parent=1 // pred_check
      _
    $region51: #{tpu_custom_call.1} parent=1 // pred_check_branch
      %700 = sbr.rel (0) target = $region53
    $region52: #{tpu_custom_call.1} parent=1 // pred_region
      %s702 = ssub.s32 64, 64
      %703 = vsyncadd [#allocation4], %s702
      %s705 = sshll.u32 [#allocation10], 4
      %s706 = int_to_ptr.vmem [resolvable:$true] %s705
      %708 = dma.vmem_to_hbm [thread:$0]  %s706, 64, %s8, [#allocation4]
    $region53: #{tpu_custom_call.1} parent=1 // pred_fallthru
      _
    // Predicated region
    $region54: #{tpu_custom_call.1} parent=1 // pred_check
      _
    $region55: #{tpu_custom_call.1} parent=1 // pred_check_branch
      %710 = sbr.rel (0) target = $region57
    $region56: #{tpu_custom_call.1} parent=1 // pred_region
      %s712 = ssub.s32 32, 32
      %713 = vsyncadd [#allocation12], %s712
      %s715 = sshll.u32 [#allocation11], 4
      %s716 = int_to_ptr.vmem [resolvable:$true] %s715
      %718 = dma.vmem_to_hbm [thread:$0]  %s716, 32, %s9, [#allocation12]
    $region57: #{tpu_custom_call.1} parent=1 // pred_fallthru
      _
    // Predicated region
    $region58: #{tpu_custom_call.1} parent=1 // pred_check
      _
    $region59: #{tpu_custom_call.1} parent=1 // pred_check_branch
      %720 = sbr.rel (0) target = $region61
    $region60: #{tpu_custom_call.1} parent=1 // pred_region
      %s722 = ssub.s32 32, 32
      %723 = vsyncadd [#allocation12], %s722
      %s725 = sshll.u32 [#allocation13], 4
      %s726 = int_to_ptr.vmem [resolvable:$true] %s725
      %728 = dma.vmem_to_hbm [thread:$0]  %s726, 32, %s10, [#allocation12]
    $region61: #{tpu_custom_call.1} parent=1 // pred_fallthru
      _
    // Predicated region
    $region62: #{tpu_custom_call.1} parent=1 // pred_check
      _
    $region63: #{tpu_custom_call.1} parent=1 // pred_check_branch
      %730 = sbr.rel (0) target = $region65
    $region64: #{tpu_custom_call.1} parent=1 // pred_region
      %731 = dma.done [#allocation4], 64
    $region65: #{tpu_custom_call.1} parent=1 // pred_fallthru
      _
    // Predicated region
    $region66: #{tpu_custom_call.1} parent=1 // pred_check
      _
    $region67: #{tpu_custom_call.1} parent=1 // pred_check_branch
      %733 = sbr.rel (0) target = $region69
    $region68: #{tpu_custom_call.1} parent=1 // pred_region
      %734 = dma.done [#allocation12], 32
    $region69: #{tpu_custom_call.1} parent=1 // pred_fallthru
      _
    // Predicated region
    $region70: #{tpu_custom_call.1} parent=1 // pred_check
      _
    $region71: #{tpu_custom_call.1} parent=1 // pred_check_branch
      %736 = sbr.rel (0) target = $region73
    $region72: #{tpu_custom_call.1} parent=1 // pred_region
      %737 = dma.done [#allocation12], 32
    $region73: #{tpu_custom_call.1} parent=1 // pred_fallthru
      _
    %738 = vsyncpa [#allocation3], 1
    %739 = vsyncpa [#allocation6], 1
    %740 = vsyncpa [#allocation9], 1
    %741 = vsyncpa [#allocation4], 1
    %742 = vsyncpa [#allocation12], 1

</llo_original>
